<compile_context>
chip_gen: v7x
topology: tpu7x:2x2x1
jax: 0.10.0
libtpu: 0.0.40
codegen_flags: <defaults>
</compile_context>

<pallas_src>
import functools
import math

import jax
import jax.numpy as jnp
from jax.experimental import pallas as pl
from jax.experimental.pallas import tpu as pltpu

# ---------------- configuration (small, consistent with the module) ----------------
D_MODEL = 32
D_FF = 64
N_HEADS = 4
KSIZE = 3
HEAD_DIM = D_MODEL // N_HEADS
EPS = 1e-5  # nn.LayerNorm default

# rows of the packed bias / LayerNorm vector table (row width = 3*D_MODEL = 96)
(ROW_BQKV, ROW_BO, ROW_LN1G, ROW_LN1B, ROW_B1,
 ROW_B2, ROW_BG, ROW_LN2G, ROW_LN2B) = range(9)
VEC_W = 3 * D_MODEL


# ---------------- in-kernel helpers ----------------
def _erf(x):
    # Abramowitz & Stegun 7.1.26 (max abs err ~1.5e-7): exp + FMAs only.
    a1, a2, a3, a4, a5 = 0.254829592, -0.284496736, 1.421413741, -1.453152027, 1.061405429
    p = 0.3275911
    sgn = jnp.where(x >= 0.0, 1.0, -1.0)
    ax = jnp.abs(x)
    t = 1.0 / (1.0 + p * ax)
    poly = ((((a5 * t + a4) * t + a3) * t + a2) * t + a1) * t
    return sgn * (1.0 - poly * jnp.exp(-ax * ax))


def _gelu_exact(x):
    # nn.GELU() default is the exact (erf) form.
    return 0.5 * x * (1.0 + _erf(x * (1.0 / math.sqrt(2.0))))


def _layer_norm(v, g, b):
    mu = jnp.mean(v, axis=-1, keepdims=True)
    var = jnp.mean((v - mu) ** 2, axis=-1, keepdims=True)
    return (v - mu) * jax.lax.rsqrt(var + EPS) * g + b


# ---------------- the Pallas kernel (BB batch elements per grid step) ----------------
def tad_block_kernel(x_ref, wqkv_ref, wo_ref, w1_ref, w2_ref, wg_ref, vec_ref, o_ref,
                     *, seq_len):
    C = D_MODEL
    xf = x_ref[...].astype(jnp.float32)              # (BB*T, C) — batch flattened into M
    bt = xf.shape[0]
    bb = bt // seq_len

    def vrow(r, width):                              # static (1, width) slice of the vector table
        return vec_ref[r:r + 1, :width]

    # ---- fused QKV projection: one (BT, C) @ (C, 3C) matmul ----
    qkv = jnp.dot(xf, wqkv_ref[...], preferred_element_type=jnp.float32) + vrow(ROW_BQKV, 3 * C)
    qkv3 = qkv.reshape(bb, seq_len, 3 * C)           # split leading dim only (T % 8 == 0 → layout-free)

    scale = 1.0 / math.sqrt(HEAD_DIM)
    row = jax.lax.broadcasted_iota(jnp.int32, (seq_len, seq_len), 0)
    col = jax.lax.broadcasted_iota(jnp.int32, (seq_len, seq_len), 1)
    # additive causal mask, built & broadcast ONCE (reused by every head)
    mask_add = jnp.where(col <= row, 0.0, -1e30).astype(jnp.float32)
    mask_add = jnp.broadcast_to(mask_add, (bb, seq_len, seq_len))

    # ---- causal MHA: per-head scores (BB-batched), deferred softmax normalization,
    #      head outputs lane-concatenated and sent through ONE W_out matmul. ----
    head_outs = []
    for h in range(N_HEADS):
        lo = h * HEAD_DIM
        qh = qkv3[:, :, lo:lo + HEAD_DIM] * scale                          # (BB, T, Dh)
        kh = qkv3[:, :, C + lo:C + lo + HEAD_DIM]
        vh = qkv3[:, :, 2 * C + lo:2 * C + lo + HEAD_DIM]
        s = jnp.einsum("bqd,bkd->bqk", qh, kh,
                       preferred_element_type=jnp.float32) + mask_add      # (BB, T, T)
        m = jnp.max(s, axis=-1, keepdims=True)
        e = jnp.exp(s - m)
        denom = jnp.sum(e, axis=-1, keepdims=True)                         # (BB, T, 1)
        ho = jnp.einsum("bqk,bkd->bqd", e, vh,
                        preferred_element_type=jnp.float32)                # un-normalized PV
        # normalize the small (BB,T,Dh) tensor, not the (BB,T,T) one
        head_outs.append(ho * pl.reciprocal(denom, approx=True))
    attn = jnp.concatenate(head_outs, axis=-1).reshape(bt, C)              # (BT, C)
    attn_out = jnp.dot(attn, wo_ref[...], preferred_element_type=jnp.float32) + vrow(ROW_BO, C)
    # dropout -> identity (inference)

    x1 = _layer_norm(xf + attn_out, vrow(ROW_LN1G, C), vrow(ROW_LN1B, C))  # (BT, C)

    # ---- causal conv branch: Conv1d(C->Dff, k=3, causal) -> GELU -> Conv1d(Dff->C, k=1)
    #      implemented as a lane-stack of time-shifted copies (pltpu.roll on the
    #      sublane axis + per-batch mask) and a single (3C, Dff) matmul. ----
    tpos = jax.lax.broadcasted_iota(jnp.int32, (bt, 1), 0) % seq_len       # time index within batch
    taps = [x1]
    for kk in range(1, KSIZE):
        shifted = pltpu.roll(x1, shift=kk, axis=0)                         # row r <- x1[r - kk]
        taps.append(jnp.where(tpos >= kk, shifted, 0.0))                   # zero left-pad / batch edge
    xstack = jnp.concatenate(taps, axis=-1)                                # (BT, 3C)
    hconv = jnp.dot(xstack, w1_ref[...], preferred_element_type=jnp.float32) + vrow(ROW_B1, D_FF)
    hconv = _gelu_exact(hconv)
    conv_out = jnp.dot(hconv, w2_ref[...], preferred_element_type=jnp.float32) + vrow(ROW_B2, C)

    # ---- gated fusion: single (2C, C) matmul on the lane-concat [x1, conv_out] ----
    gin = jnp.concatenate([x1, conv_out], axis=-1)                         # (BT, 2C)
    gate = jax.nn.sigmoid(jnp.dot(gin, wg_ref[...], preferred_element_type=jnp.float32)
                          + vrow(ROW_BG, C))
    fused = gate * x1 + (1.0 - gate) * conv_out

    out = _layer_norm(xf + fused, vrow(ROW_LN2G, C), vrow(ROW_LN2B, C))
    o_ref[...] = out.astype(o_ref.dtype)


# ---------------- block-size / VMEM heuristics ----------------
def _block_footprint_bytes(bb, T):
    blk = bb * T
    acts = blk * 560 * 4                        # qkv/x1/xstack/hconv/conv_out/gate/out slabs
    scores = bb * N_HEADS * T * T * 4 * 3       # live attention score tensors (unrolled heads)
    io = 2 * 2 * blk * D_MODEL * 4              # double-buffered in + out blocks
    return acts + scores + io


def _default_batch_block(B, T):
    # Enough grid steps to overlap DMA with compute and to shard across v7x's
    # 2 TensorCores, while keeping blocks large enough to amortize the
    # ~0.35 us per-step pipeline overhead.
    target_steps = min(B, 8)
    bb = 1
    for cand in range(B, 0, -1):
        if B % cand == 0 and B // cand >= target_steps:
            bb = cand
            break
    # Keep per-block footprint comfortably inside v7x's 64 MiB VMEM.
    while bb > 1 and _block_footprint_bytes(bb, T) > (12 << 20):
        nb = bb - 1
        while nb > 1 and B % nb != 0:
            nb -= 1
        bb = nb
    return bb


# ---------------- wrapper ----------------
def tad_block(x, packed, *, batch_block=None):
    B, T, C = x.shape
    assert C == D_MODEL and T % 8 == 0
    bb = _default_batch_block(B, T) if batch_block is None else batch_block
    assert B % bb == 0
    blk = bb * T
    grid = (B // bb,)

    xf = x.reshape(B * T, C)     # free: only collapses leading dims, C stays on lanes
    param_list = [packed["w_qkv"], packed["wo_t"], packed["w1_flat"],
                  packed["w2_t"], packed["wg_cat"], packed["vecs"]]

    in_specs = [pl.BlockSpec((blk, C), lambda b: (b, 0))] + \
               [pl.BlockSpec(p.shape, lambda b: (0, 0)) for p in param_list]

    # explicit scoped-VMEM budget (defaults are only 16 MiB on v5e, 32 MiB on v6e/v7x)
    param_bytes = sum(int(p.size) * 4 for p in param_list)
    est = _block_footprint_bytes(bb, T) + 2 * param_bytes
    vmem_limit = int(min(max(2 * est, 32 << 20), 48 << 20))   # headroom; stays < v7x 64 MiB

    # advisory cost estimate for XLA's scheduler
    flops = (2 * B * T * C * (3 * C) + 4 * B * T * T * C + 2 * B * T * C * C
             + 2 * B * T * (3 * C) * D_FF + 2 * B * T * D_FF * C + 2 * B * T * (2 * C) * C)
    transcendentals = B * N_HEADS * T * T + B * T * D_FF + B * T * C
    bytes_accessed = 2 * B * T * C * 4 + param_bytes

    out = pl.pallas_call(
        functools.partial(tad_block_kernel, seq_len=T),
        out_shape=jax.ShapeDtypeStruct((B * T, C), x.dtype),
        grid=grid,
        in_specs=in_specs,
        out_specs=pl.BlockSpec((blk, C), lambda b: (b, 0)),
        compiler_params=pltpu.CompilerParams(
            dimension_semantics=("parallel",),
            vmem_limit_bytes=vmem_limit),
        cost_estimate=pl.CostEstimate(flops=flops,
                                      transcendentals=transcendentals,
                                      bytes_accessed=bytes_accessed),
    )(xf, *param_list)
    return out.reshape(B, T, C)


# ---------------- deterministic parameter init (raw, un-fused form) ----------------
def init_params(key):
    ks = jax.random.split(key, 19)
    n = lambda k, shape, s=0.05: (s * jax.random.normal(k, shape)).astype(jnp.float32)
    C, Dff = D_MODEL, D_FF
    return {
        # attention in/out projections (stored pre-transposed: y = x @ W^T -> x @ w_t)
        "wq_t": n(ks[0], (C, C)), "wk_t": n(ks[1], (C, C)), "wv_t": n(ks[2], (C, C)),
        "bq": n(ks[3], (C,)), "bk": n(ks[4], (C,)), "bv": n(ks[5], (C,)),
        "wo_t": n(ks[6], (C, C)), "bo": n(ks[7], (C,)),
        # LayerNorms
        "ln1_g": 1.0 + n(ks[8], (C,), 0.01), "ln1_b": n(ks[9], (C,), 0.01),
        "ln2_g": 1.0 + n(ks[10], (C,), 0.01), "ln2_b": n(ks[11], (C,), 0.01),
        # causal conv: w1[m] multiplies x1[t - m]  (== transposed Conv1d tap k-1-m)
        "w1": n(ks[12], (KSIZE, C, Dff)), "b1c": n(ks[13], (Dff,)),
        "w2_t": n(ks[14], (Dff, C)), "b2c": n(ks[15], (C,)),
        # gate Linear(2C -> C), split into x-half and conv-half of the weight
        "wg_x_t": n(ks[16], (C, C)), "wg_c_t": n(ks[17], (C, C)), "bg": n(ks[18], (C,)),
    }


# ---------------- pack raw params into the fused kernel layout ----------------
def pack_params(p):
    C, Dff = D_MODEL, D_FF

    def padrow(v):
        return jnp.pad(v, (0, VEC_W - v.shape[0]))

    vecs = jnp.stack([
        jnp.concatenate([p["bq"], p["bk"], p["bv"]]),   # ROW_BQKV (width 3C)
        padrow(p["bo"]),                                # ROW_BO
        padrow(p["ln1_g"]), padrow(p["ln1_b"]),         # ROW_LN1G / ROW_LN1B
        padrow(p["b1c"]), padrow(p["b2c"]),             # ROW_B1 / ROW_B2
        padrow(p["bg"]),                                # ROW_BG
        padrow(p["ln2_g"]), padrow(p["ln2_b"]),         # ROW_LN2G / ROW_LN2B
    ]).astype(jnp.float32)                              # (9, 96)

    return {
        "w_qkv": jnp.concatenate([p["wq_t"], p["wk_t"], p["wv_t"]], axis=1),  # (C, 3C)
        "wo_t": p["wo_t"],                                                    # (C, C)
        "w1_flat": p["w1"].reshape(KSIZE * C, Dff),                           # (3C, Dff), rows m*C:(m+1)*C = lag-m tap
        "w2_t": p["w2_t"],                                                    # (Dff, C)
        "wg_cat": jnp.concatenate([p["wg_x_t"], p["wg_c_t"]], axis=0),        # (2C, C)
        "vecs": vecs,
    }


# ---------------- pure-JAX reference (mirrors the PyTorch forward) ----------------
def reference(x, p):
    B, T, C = x.shape
    H, Dh = N_HEADS, HEAD_DIM
    q = x @ p["wq_t"] + p["bq"]
    k = x @ p["wk_t"] + p["bk"]
    v = x @ p["wv_t"] + p["bv"]
    qh = q.reshape(B, T, H, Dh).transpose(0, 2, 1, 3)
    kh = k.reshape(B, T, H, Dh).transpose(0, 2, 1, 3)
    vh = v.reshape(B, T, H, Dh).transpose(0, 2, 1, 3)
    s = jnp.einsum("bhtd,bhsd->bhts", qh, kh) / math.sqrt(Dh)
    mask = jnp.triu(jnp.ones((T, T), bool), 1)
    s = jnp.where(mask, -jnp.inf, s)
    pa = jax.nn.softmax(s, axis=-1)
    ao = jnp.einsum("bhts,bhsd->bhtd", pa, vh).transpose(0, 2, 1, 3).reshape(B, T, C)
    ao = ao @ p["wo_t"] + p["bo"]

    def ln(v_, g, b):
        mu = jnp.mean(v_, -1, keepdims=True)
        var = jnp.mean((v_ - mu) ** 2, -1, keepdims=True)
        return (v_ - mu) * jax.lax.rsqrt(var + EPS) * g + b

    x1 = ln(x + ao, p["ln1_g"], p["ln1_b"])

    # causal conv (Conv1d pad=k-1 + trailing slice) expressed as a lag sum
    h = jnp.zeros((B, T, D_FF)) + p["b1c"]
    for m in range(KSIZE):
        xs = jnp.pad(x1, ((0, 0), (m, 0), (0, 0)))[:, :T, :]   # x1[t - m], zero for t < m
        h = h + jnp.einsum("btc,cf->btf", xs, p["w1"][m])
    h = jax.nn.gelu(h, approximate=False)
    conv = h @ p["w2_t"] + p["b2c"]

    g = jax.nn.sigmoid(x1 @ p["wg_x_t"] + conv @ p["wg_c_t"] + p["bg"])
    fused = g * x1 + (1.0 - g) * conv
    return ln(x + fused, p["ln2_g"], p["ln2_b"])


if __name__ == "__main__":
    key = jax.random.PRNGKey(0)
    kx, kp = jax.random.split(key)
    B, T = 2, 8
    x = jax.random.normal(kx, (B, T, D_MODEL), dtype=jnp.float32)
    raw = init_params(kp)
    packed = pack_params(raw)

    out = jax.block_until_ready(tad_block(x, packed))   # default: grid=(2,), pipelined
    ref = jax.block_until_ready(reference(x, raw))

    assert out.shape == (B, T, D_MODEL)
    err = float(jnp.max(jnp.abs(out - ref)))
    assert jnp.allclose(out, ref, atol=1e-3, rtol=1e-3), err
    print("KERNEL_OK")
</pallas_src>

<mosaic_0001>
module attributes {stable_mosaic.version = 11 : i64} {
  func.func @tad_block_kernel(%arg0: i32, %arg1: memref<8x32xf32, #tpu.memory_space<vmem>>, %arg2: memref<32x96xf32, #tpu.memory_space<vmem>>, %arg3: memref<32x32xf32, #tpu.memory_space<vmem>>, %arg4: memref<96x64xf32, #tpu.memory_space<vmem>>, %arg5: memref<64x32xf32, #tpu.memory_space<vmem>>, %arg6: memref<64x32xf32, #tpu.memory_space<vmem>>, %arg7: memref<9x96xf32, #tpu.memory_space<vmem>>, %arg8: memref<8x32xf32, #tpu.memory_space<vmem>>) attributes {dimension_semantics = [#tpu.dimension_semantics<parallel>], iteration_bounds = array<i64: 2>, scalar_prefetch = 0 : i64, scratch_operands = 0 : i64, tpu.core_type = #tpu.core_type<tc>, window_params = [{transform_indices = @transform_0, window_bounds = array<i64: 8, 32>}, {pipeline_mode = #tpu.pipeline_mode<synchronous>, transform_indices = @transform_1, window_bounds = array<i64: 32, 96>}, {pipeline_mode = #tpu.pipeline_mode<synchronous>, transform_indices = @transform_2, window_bounds = array<i64: 32, 32>}, {pipeline_mode = #tpu.pipeline_mode<synchronous>, transform_indices = @transform_3, window_bounds = array<i64: 96, 64>}, {pipeline_mode = #tpu.pipeline_mode<synchronous>, transform_indices = @transform_4, window_bounds = array<i64: 64, 32>}, {pipeline_mode = #tpu.pipeline_mode<synchronous>, transform_indices = @transform_5, window_bounds = array<i64: 64, 32>}, {pipeline_mode = #tpu.pipeline_mode<synchronous>, transform_indices = @transform_6, window_bounds = array<i64: 9, 96>}, {transform_indices = @transform_7, window_bounds = array<i64: 8, 32>}]} {
    %c0 = arith.constant 0 : index
    %c0_0 = arith.constant 0 : index
    %0 = vector.load %arg1[%c0, %c0_0] : memref<8x32xf32, #tpu.memory_space<vmem>>, vector<8x32xf32>
    %c0_1 = arith.constant 0 : index
    %c0_2 = arith.constant 0 : index
    %1 = vector.load %arg2[%c0_1, %c0_2] : memref<32x96xf32, #tpu.memory_space<vmem>>, vector<32x96xf32>
    %cst = arith.constant dense<0.000000e+00> : vector<8x96xf32>
    %2 = tpu.matmul %0, %1, %cst {dimension_numbers = #tpu.dot_dimension_numbers<[1], [0], [0], [1], [0, 0, 1, 1], [], []>} : vector<8x32xf32>, vector<32x96xf32>, vector<8x96xf32> -> vector<8x96xf32>
    %c0_3 = arith.constant 0 : index
    %c0_4 = arith.constant 0 : index
    %3 = vector.load %arg7[%c0_3, %c0_4] : memref<9x96xf32, #tpu.memory_space<vmem>>, vector<1x96xf32>
    %4 = vector.broadcast %3 : vector<1x96xf32> to vector<8x96xf32>
    %5 = arith.addf %2, %4 : vector<8x96xf32>
    %6 = vector.shape_cast %5 : vector<8x96xf32> to vector<1x8x96xf32>
    %7 = tpu.iota {dimensions = array<i32: 0>} : vector<8x8xi32>
    %8 = tpu.iota {dimensions = array<i32: 1>} : vector<8x8xi32>
    %9 = arith.cmpi sle, %8, %7 : vector<8x8xi32>
    %cst_5 = arith.constant 0.000000e+00 : f32
    %cst_6 = arith.constant -1.000000e+30 : f32
    %10 = vector.broadcast %cst_5 : f32 to vector<8x8xf32>
    %11 = vector.broadcast %cst_6 : f32 to vector<8x8xf32>
    %12 = arith.select %9, %10, %11 : vector<8x8xi1>, vector<8x8xf32>
    %13 = vector.shape_cast %12 : vector<8x8xf32> to vector<1x8x8xf32>
    %14 = vector.extract_strided_slice %6 {offsets = [0, 0, 0], sizes = [1, 8, 8], strides = [1, 1, 1]} : vector<1x8x96xf32> to vector<1x8x8xf32>
    %cst_7 = arith.constant 0.353553385 : f32
    %15 = vector.broadcast %cst_7 : f32 to vector<1x8x8xf32>
    %16 = arith.mulf %14, %15 : vector<1x8x8xf32>
    %17 = vector.extract_strided_slice %6 {offsets = [0, 0, 32], sizes = [1, 8, 8], strides = [1, 1, 1]} : vector<1x8x96xf32> to vector<1x8x8xf32>
    %18 = vector.extract_strided_slice %6 {offsets = [0, 0, 64], sizes = [1, 8, 8], strides = [1, 1, 1]} : vector<1x8x96xf32> to vector<1x8x8xf32>
    "tpu.trace_start"() <{level = 10 : i32, message = "bqd,bkd->bqk"}> : () -> ()
    %cst_8 = arith.constant dense<0.000000e+00> : vector<1x8x8xf32>
    %19 = tpu.matmul %16, %17, %cst_8 {dimension_numbers = #tpu.dot_dimension_numbers<[2], [2], [1], [1], [0, 0, 0, 1, 1, 1], [0], [0]>} : vector<1x8x8xf32>, vector<1x8x8xf32>, vector<1x8x8xf32> -> vector<1x8x8xf32>
    "tpu.trace_stop"() : () -> ()
    %20 = arith.addf %19, %13 : vector<1x8x8xf32>
    %cst_9 = arith.constant dense<0xFF800000> : vector<1x8xf32>
    %21 = vector.multi_reduction <maximumf>, %20, %cst_9 [2] : vector<1x8x8xf32> to vector<1x8xf32>
    %22 = vector.shape_cast %21 : vector<1x8xf32> to vector<1x8x1xf32>
    %23 = vector.broadcast %22 : vector<1x8x1xf32> to vector<1x8x8xf32>
    %24 = arith.subf %20, %23 : vector<1x8x8xf32>
    %25 = math.exp %24 : vector<1x8x8xf32>
    %cst_10 = arith.constant dense<0.000000e+00> : vector<1x8xf32>
    %26 = vector.multi_reduction <add>, %25, %cst_10 [2] : vector<1x8x8xf32> to vector<1x8xf32>
    %27 = vector.shape_cast %26 : vector<1x8xf32> to vector<1x8x1xf32>
    "tpu.trace_start"() <{level = 10 : i32, message = "bqk,bkd->bqd"}> : () -> ()
    %cst_11 = arith.constant dense<0.000000e+00> : vector<1x8x8xf32>
    %28 = tpu.matmul %25, %18, %cst_11 {dimension_numbers = #tpu.dot_dimension_numbers<[2], [1], [1], [2], [0, 0, 0, 1, 1, 2], [0], [0]>} : vector<1x8x8xf32>, vector<1x8x8xf32>, vector<1x8x8xf32> -> vector<1x8x8xf32>
    "tpu.trace_stop"() : () -> ()
    %29 = tpu.reciprocal %27 {approx = true} : vector<1x8x1xf32> -> vector<1x8x1xf32>
    %30 = vector.broadcast %29 : vector<1x8x1xf32> to vector<1x8x8xf32>
    %31 = arith.mulf %28, %30 : vector<1x8x8xf32>
    %32 = vector.extract_strided_slice %6 {offsets = [0, 0, 8], sizes = [1, 8, 8], strides = [1, 1, 1]} : vector<1x8x96xf32> to vector<1x8x8xf32>
    %cst_12 = arith.constant 0.353553385 : f32
    %33 = vector.broadcast %cst_12 : f32 to vector<1x8x8xf32>
    %34 = arith.mulf %32, %33 : vector<1x8x8xf32>
    %35 = vector.extract_strided_slice %6 {offsets = [0, 0, 40], sizes = [1, 8, 8], strides = [1, 1, 1]} : vector<1x8x96xf32> to vector<1x8x8xf32>
    %36 = vector.extract_strided_slice %6 {offsets = [0, 0, 72], sizes = [1, 8, 8], strides = [1, 1, 1]} : vector<1x8x96xf32> to vector<1x8x8xf32>
    "tpu.trace_start"() <{level = 10 : i32, message = "bqd,bkd->bqk"}> : () -> ()
    %cst_13 = arith.constant dense<0.000000e+00> : vector<1x8x8xf32>
    %37 = tpu.matmul %34, %35, %cst_13 {dimension_numbers = #tpu.dot_dimension_numbers<[2], [2], [1], [1], [0, 0, 0, 1, 1, 1], [0], [0]>} : vector<1x8x8xf32>, vector<1x8x8xf32>, vector<1x8x8xf32> -> vector<1x8x8xf32>
    "tpu.trace_stop"() : () -> ()
    %38 = arith.addf %37, %13 : vector<1x8x8xf32>
    %cst_14 = arith.constant dense<0xFF800000> : vector<1x8xf32>
    %39 = vector.multi_reduction <maximumf>, %38, %cst_14 [2] : vector<1x8x8xf32> to vector<1x8xf32>
    %40 = vector.shape_cast %39 : vector<1x8xf32> to vector<1x8x1xf32>
    %41 = vector.broadcast %40 : vector<1x8x1xf32> to vector<1x8x8xf32>
    %42 = arith.subf %38, %41 : vector<1x8x8xf32>
    %43 = math.exp %42 : vector<1x8x8xf32>
    %cst_15 = arith.constant dense<0.000000e+00> : vector<1x8xf32>
    %44 = vector.multi_reduction <add>, %43, %cst_15 [2] : vector<1x8x8xf32> to vector<1x8xf32>
    %45 = vector.shape_cast %44 : vector<1x8xf32> to vector<1x8x1xf32>
    "tpu.trace_start"() <{level = 10 : i32, message = "bqk,bkd->bqd"}> : () -> ()
    %cst_16 = arith.constant dense<0.000000e+00> : vector<1x8x8xf32>
    %46 = tpu.matmul %43, %36, %cst_16 {dimension_numbers = #tpu.dot_dimension_numbers<[2], [1], [1], [2], [0, 0, 0, 1, 1, 2], [0], [0]>} : vector<1x8x8xf32>, vector<1x8x8xf32>, vector<1x8x8xf32> -> vector<1x8x8xf32>
    "tpu.trace_stop"() : () -> ()
    %47 = tpu.reciprocal %45 {approx = true} : vector<1x8x1xf32> -> vector<1x8x1xf32>
    %48 = vector.broadcast %47 : vector<1x8x1xf32> to vector<1x8x8xf32>
    %49 = arith.mulf %46, %48 : vector<1x8x8xf32>
    %50 = vector.extract_strided_slice %6 {offsets = [0, 0, 16], sizes = [1, 8, 8], strides = [1, 1, 1]} : vector<1x8x96xf32> to vector<1x8x8xf32>
    %cst_17 = arith.constant 0.353553385 : f32
    %51 = vector.broadcast %cst_17 : f32 to vector<1x8x8xf32>
    %52 = arith.mulf %50, %51 : vector<1x8x8xf32>
    %53 = vector.extract_strided_slice %6 {offsets = [0, 0, 48], sizes = [1, 8, 8], strides = [1, 1, 1]} : vector<1x8x96xf32> to vector<1x8x8xf32>
    %54 = vector.extract_strided_slice %6 {offsets = [0, 0, 80], sizes = [1, 8, 8], strides = [1, 1, 1]} : vector<1x8x96xf32> to vector<1x8x8xf32>
    "tpu.trace_start"() <{level = 10 : i32, message = "bqd,bkd->bqk"}> : () -> ()
    %cst_18 = arith.constant dense<0.000000e+00> : vector<1x8x8xf32>
    %55 = tpu.matmul %52, %53, %cst_18 {dimension_numbers = #tpu.dot_dimension_numbers<[2], [2], [1], [1], [0, 0, 0, 1, 1, 1], [0], [0]>} : vector<1x8x8xf32>, vector<1x8x8xf32>, vector<1x8x8xf32> -> vector<1x8x8xf32>
    "tpu.trace_stop"() : () -> ()
    %56 = arith.addf %55, %13 : vector<1x8x8xf32>
    %cst_19 = arith.constant dense<0xFF800000> : vector<1x8xf32>
    %57 = vector.multi_reduction <maximumf>, %56, %cst_19 [2] : vector<1x8x8xf32> to vector<1x8xf32>
    %58 = vector.shape_cast %57 : vector<1x8xf32> to vector<1x8x1xf32>
    %59 = vector.broadcast %58 : vector<1x8x1xf32> to vector<1x8x8xf32>
    %60 = arith.subf %56, %59 : vector<1x8x8xf32>
    %61 = math.exp %60 : vector<1x8x8xf32>
    %cst_20 = arith.constant dense<0.000000e+00> : vector<1x8xf32>
    %62 = vector.multi_reduction <add>, %61, %cst_20 [2] : vector<1x8x8xf32> to vector<1x8xf32>
    %63 = vector.shape_cast %62 : vector<1x8xf32> to vector<1x8x1xf32>
    "tpu.trace_start"() <{level = 10 : i32, message = "bqk,bkd->bqd"}> : () -> ()
    %cst_21 = arith.constant dense<0.000000e+00> : vector<1x8x8xf32>
    %64 = tpu.matmul %61, %54, %cst_21 {dimension_numbers = #tpu.dot_dimension_numbers<[2], [1], [1], [2], [0, 0, 0, 1, 1, 2], [0], [0]>} : vector<1x8x8xf32>, vector<1x8x8xf32>, vector<1x8x8xf32> -> vector<1x8x8xf32>
    "tpu.trace_stop"() : () -> ()
    %65 = tpu.reciprocal %63 {approx = true} : vector<1x8x1xf32> -> vector<1x8x1xf32>
    %66 = vector.broadcast %65 : vector<1x8x1xf32> to vector<1x8x8xf32>
    %67 = arith.mulf %64, %66 : vector<1x8x8xf32>
    %68 = vector.extract_strided_slice %6 {offsets = [0, 0, 24], sizes = [1, 8, 8], strides = [1, 1, 1]} : vector<1x8x96xf32> to vector<1x8x8xf32>
    %cst_22 = arith.constant 0.353553385 : f32
    %69 = vector.broadcast %cst_22 : f32 to vector<1x8x8xf32>
    %70 = arith.mulf %68, %69 : vector<1x8x8xf32>
    %71 = vector.extract_strided_slice %6 {offsets = [0, 0, 56], sizes = [1, 8, 8], strides = [1, 1, 1]} : vector<1x8x96xf32> to vector<1x8x8xf32>
    %72 = vector.extract_strided_slice %6 {offsets = [0, 0, 88], sizes = [1, 8, 8], strides = [1, 1, 1]} : vector<1x8x96xf32> to vector<1x8x8xf32>
    "tpu.trace_start"() <{level = 10 : i32, message = "bqd,bkd->bqk"}> : () -> ()
    %cst_23 = arith.constant dense<0.000000e+00> : vector<1x8x8xf32>
    %73 = tpu.matmul %70, %71, %cst_23 {dimension_numbers = #tpu.dot_dimension_numbers<[2], [2], [1], [1], [0, 0, 0, 1, 1, 1], [0], [0]>} : vector<1x8x8xf32>, vector<1x8x8xf32>, vector<1x8x8xf32> -> vector<1x8x8xf32>
    "tpu.trace_stop"() : () -> ()
    %74 = arith.addf %73, %13 : vector<1x8x8xf32>
    %cst_24 = arith.constant dense<0xFF800000> : vector<1x8xf32>
    %75 = vector.multi_reduction <maximumf>, %74, %cst_24 [2] : vector<1x8x8xf32> to vector<1x8xf32>
    %76 = vector.shape_cast %75 : vector<1x8xf32> to vector<1x8x1xf32>
    %77 = vector.broadcast %76 : vector<1x8x1xf32> to vector<1x8x8xf32>
    %78 = arith.subf %74, %77 : vector<1x8x8xf32>
    %79 = math.exp %78 : vector<1x8x8xf32>
    %cst_25 = arith.constant dense<0.000000e+00> : vector<1x8xf32>
    %80 = vector.multi_reduction <add>, %79, %cst_25 [2] : vector<1x8x8xf32> to vector<1x8xf32>
    %81 = vector.shape_cast %80 : vector<1x8xf32> to vector<1x8x1xf32>
    "tpu.trace_start"() <{level = 10 : i32, message = "bqk,bkd->bqd"}> : () -> ()
    %cst_26 = arith.constant dense<0.000000e+00> : vector<1x8x8xf32>
    %82 = tpu.matmul %79, %72, %cst_26 {dimension_numbers = #tpu.dot_dimension_numbers<[2], [1], [1], [2], [0, 0, 0, 1, 1, 2], [0], [0]>} : vector<1x8x8xf32>, vector<1x8x8xf32>, vector<1x8x8xf32> -> vector<1x8x8xf32>
    "tpu.trace_stop"() : () -> ()
    %83 = tpu.reciprocal %81 {approx = true} : vector<1x8x1xf32> -> vector<1x8x1xf32>
    %84 = vector.broadcast %83 : vector<1x8x1xf32> to vector<1x8x8xf32>
    %85 = arith.mulf %82, %84 : vector<1x8x8xf32>
    %86 = tpu.concatenate %31, %49, %67, %85 in 2 : vector<1x8x8xf32>, vector<1x8x8xf32>, vector<1x8x8xf32>, vector<1x8x8xf32> -> vector<1x8x32xf32>
    %87 = vector.shape_cast %86 : vector<1x8x32xf32> to vector<8x32xf32>
    %c0_27 = arith.constant 0 : index
    %c0_28 = arith.constant 0 : index
    %88 = vector.load %arg3[%c0_27, %c0_28] : memref<32x32xf32, #tpu.memory_space<vmem>>, vector<32x32xf32>
    %cst_29 = arith.constant dense<0.000000e+00> : vector<8x32xf32>
    %89 = tpu.matmul %87, %88, %cst_29 {dimension_numbers = #tpu.dot_dimension_numbers<[1], [0], [0], [1], [0, 0, 1, 1], [], []>} : vector<8x32xf32>, vector<32x32xf32>, vector<8x32xf32> -> vector<8x32xf32>
    %c1 = arith.constant 1 : index
    %c0_30 = arith.constant 0 : index
    %90 = vector.load %arg7[%c1, %c0_30] : memref<9x96xf32, #tpu.memory_space<vmem>>, vector<1x32xf32>
    %91 = vector.broadcast %90 : vector<1x32xf32> to vector<8x32xf32>
    %92 = arith.addf %89, %91 : vector<8x32xf32>
    %93 = arith.addf %0, %92 : vector<8x32xf32>
    %c2 = arith.constant 2 : index
    %c0_31 = arith.constant 0 : index
    %94 = vector.load %arg7[%c2, %c0_31] : memref<9x96xf32, #tpu.memory_space<vmem>>, vector<1x32xf32>
    %c3 = arith.constant 3 : index
    %c0_32 = arith.constant 0 : index
    %95 = vector.load %arg7[%c3, %c0_32] : memref<9x96xf32, #tpu.memory_space<vmem>>, vector<1x32xf32>
    %cst_33 = arith.constant dense<0.000000e+00> : vector<8xf32>
    %96 = vector.multi_reduction <add>, %93, %cst_33 [1] : vector<8x32xf32> to vector<8xf32>
    %97 = vector.shape_cast %96 : vector<8xf32> to vector<8x1xf32>
    %cst_34 = arith.constant 3.200000e+01 : f32
    %98 = vector.broadcast %cst_34 : f32 to vector<8x1xf32>
    %99 = arith.divf %97, %98 : vector<8x1xf32>
    %100 = vector.broadcast %99 : vector<8x1xf32> to vector<8x32xf32>
    %101 = arith.subf %93, %100 : vector<8x32xf32>
    %102 = arith.mulf %101, %101 : vector<8x32xf32>
    %cst_35 = arith.constant dense<0.000000e+00> : vector<8xf32>
    %103 = vector.multi_reduction <add>, %102, %cst_35 [1] : vector<8x32xf32> to vector<8xf32>
    %104 = vector.shape_cast %103 : vector<8xf32> to vector<8x1xf32>
    %cst_36 = arith.constant 3.200000e+01 : f32
    %105 = vector.broadcast %cst_36 : f32 to vector<8x1xf32>
    %106 = arith.divf %104, %105 : vector<8x1xf32>
    %107 = vector.broadcast %99 : vector<8x1xf32> to vector<8x32xf32>
    %108 = arith.subf %93, %107 : vector<8x32xf32>
    %cst_37 = arith.constant 9.99999974E-6 : f32
    %109 = vector.broadcast %cst_37 : f32 to vector<8x1xf32>
    %110 = arith.addf %106, %109 : vector<8x1xf32>
    %111 = math.rsqrt %110 : vector<8x1xf32>
    %112 = vector.broadcast %111 : vector<8x1xf32> to vector<8x32xf32>
    %113 = arith.mulf %108, %112 : vector<8x32xf32>
    %114 = vector.broadcast %94 : vector<1x32xf32> to vector<8x32xf32>
    %115 = arith.mulf %113, %114 : vector<8x32xf32>
    %116 = vector.broadcast %95 : vector<1x32xf32> to vector<8x32xf32>
    %117 = arith.addf %115, %116 : vector<8x32xf32>
    %118 = tpu.iota {dimensions = array<i32: 0>} : vector<8x1xi32>
    %c8_i32 = arith.constant 8 : i32
    %c0_i32 = arith.constant 0 : i32
    %119 = arith.cmpi eq, %c8_i32, %c0_i32 : i32
    %c1_i32 = arith.constant 1 : i32
    %120 = arith.select %119, %c1_i32, %c8_i32 : i32
    %121 = vector.broadcast %120 : i32 to vector<8x1xi32>
    %122 = arith.remsi %118, %121 : vector<8x1xi32>
    %c0_i32_38 = arith.constant 0 : i32
    %123 = vector.broadcast %c0_i32_38 : i32 to vector<8x1xi32>
    %124 = arith.cmpi ne, %122, %123 : vector<8x1xi32>
    %c0_i32_39 = arith.constant 0 : i32
    %125 = vector.broadcast %c0_i32_39 : i32 to vector<8x1xi32>
    %126 = arith.cmpi slt, %122, %125 : vector<8x1xi32>
    %c0_i32_40 = arith.constant 0 : i32
    %127 = arith.cmpi slt, %120, %c0_i32_40 : i32
    %128 = vector.broadcast %127 : i1 to vector<8x1xi1>
    %129 = vector.broadcast %128 : vector<8x1xi1> to vector<8x1xi1>
    %130 = arith.xori %126, %129 : vector<8x1xi1>
    %131 = arith.andi %130, %124 : vector<8x1xi1>
    %132 = vector.broadcast %120 : i32 to vector<8x1xi32>
    %133 = arith.addi %122, %132 : vector<8x1xi32>
    %134 = arith.select %131, %133, %122 : vector<8x1xi1>, vector<8x1xi32>
    %c1_i32_41 = arith.constant 1 : i32
    %135 = tpu.dynamic_rotate %117 by %c1_i32_41 dim 0 : vector<8x32xf32>, i32 -> vector<8x32xf32>
    %c1_i32_42 = arith.constant 1 : i32
    %136 = vector.broadcast %c1_i32_42 : i32 to vector<8x1xi32>
    %137 = arith.cmpi sge, %134, %136 : vector<8x1xi32>
    %cst_43 = arith.constant 0.000000e+00 : f32
    %138 = vector.shape_cast %137 : vector<8x1xi1> to vector<8x1xi1>
    %139 = vector.broadcast %138 : vector<8x1xi1> to vector<8x32xi1>
    %140 = vector.broadcast %cst_43 : f32 to vector<8x32xf32>
    %141 = arith.select %139, %135, %140 : vector<8x32xi1>, vector<8x32xf32>
    %c2_i32 = arith.constant 2 : i32
    %142 = tpu.dynamic_rotate %117 by %c2_i32 dim 0 : vector<8x32xf32>, i32 -> vector<8x32xf32>
    %c2_i32_44 = arith.constant 2 : i32
    %143 = vector.broadcast %c2_i32_44 : i32 to vector<8x1xi32>
    %144 = arith.cmpi sge, %134, %143 : vector<8x1xi32>
    %cst_45 = arith.constant 0.000000e+00 : f32
    %145 = vector.shape_cast %144 : vector<8x1xi1> to vector<8x1xi1>
    %146 = vector.broadcast %145 : vector<8x1xi1> to vector<8x32xi1>
    %147 = vector.broadcast %cst_45 : f32 to vector<8x32xf32>
    %148 = arith.select %146, %142, %147 : vector<8x32xi1>, vector<8x32xf32>
    %149 = tpu.concatenate %117, %141, %148 in 1 : vector<8x32xf32>, vector<8x32xf32>, vector<8x32xf32> -> vector<8x96xf32>
    %c0_46 = arith.constant 0 : index
    %c0_47 = arith.constant 0 : index
    %150 = vector.load %arg4[%c0_46, %c0_47] : memref<96x64xf32, #tpu.memory_space<vmem>>, vector<96x64xf32>
    %cst_48 = arith.constant dense<0.000000e+00> : vector<8x64xf32>
    %151 = tpu.matmul %149, %150, %cst_48 {dimension_numbers = #tpu.dot_dimension_numbers<[1], [0], [0], [1], [0, 0, 1, 1], [], []>} : vector<8x96xf32>, vector<96x64xf32>, vector<8x64xf32> -> vector<8x64xf32>
    %c4 = arith.constant 4 : index
    %c0_49 = arith.constant 0 : index
    %152 = vector.load %arg7[%c4, %c0_49] : memref<9x96xf32, #tpu.memory_space<vmem>>, vector<1x64xf32>
    %153 = vector.broadcast %152 : vector<1x64xf32> to vector<8x64xf32>
    %154 = arith.addf %151, %153 : vector<8x64xf32>
    %cst_50 = arith.constant 5.000000e-01 : f32
    %155 = vector.broadcast %cst_50 : f32 to vector<8x64xf32>
    %156 = arith.mulf %155, %154 : vector<8x64xf32>
    %cst_51 = arith.constant 0.707106769 : f32
    %157 = vector.broadcast %cst_51 : f32 to vector<8x64xf32>
    %158 = arith.mulf %154, %157 : vector<8x64xf32>
    %cst_52 = arith.constant 0.000000e+00 : f32
    %159 = vector.broadcast %cst_52 : f32 to vector<8x64xf32>
    %160 = arith.cmpf oge, %158, %159 : vector<8x64xf32>
    %cst_53 = arith.constant 1.000000e+00 : f32
    %cst_54 = arith.constant -1.000000e+00 : f32
    %161 = vector.broadcast %cst_53 : f32 to vector<8x64xf32>
    %162 = vector.broadcast %cst_54 : f32 to vector<8x64xf32>
    %163 = arith.select %160, %161, %162 : vector<8x64xi1>, vector<8x64xf32>
    %164 = math.absf %158 : vector<8x64xf32>
    %cst_55 = arith.constant 0.327591091 : f32
    %165 = vector.broadcast %cst_55 : f32 to vector<8x64xf32>
    %166 = arith.mulf %165, %164 : vector<8x64xf32>
    %cst_56 = arith.constant 1.000000e+00 : f32
    %167 = vector.broadcast %cst_56 : f32 to vector<8x64xf32>
    %168 = arith.addf %167, %166 : vector<8x64xf32>
    %cst_57 = arith.constant 1.000000e+00 : f32
    %169 = vector.broadcast %cst_57 : f32 to vector<8x64xf32>
    %170 = arith.divf %169, %168 : vector<8x64xf32>
    %cst_58 = arith.constant 1.06140542 : f32
    %171 = vector.broadcast %cst_58 : f32 to vector<8x64xf32>
    %172 = arith.mulf %171, %170 : vector<8x64xf32>
    %cst_59 = arith.constant -1.45315206 : f32
    %173 = vector.broadcast %cst_59 : f32 to vector<8x64xf32>
    %174 = arith.addf %172, %173 : vector<8x64xf32>
    %175 = arith.mulf %174, %170 : vector<8x64xf32>
    %cst_60 = arith.constant 1.42141378 : f32
    %176 = vector.broadcast %cst_60 : f32 to vector<8x64xf32>
    %177 = arith.addf %175, %176 : vector<8x64xf32>
    %178 = arith.mulf %177, %170 : vector<8x64xf32>
    %cst_61 = arith.constant -0.284496725 : f32
    %179 = vector.broadcast %cst_61 : f32 to vector<8x64xf32>
    %180 = arith.addf %178, %179 : vector<8x64xf32>
    %181 = arith.mulf %180, %170 : vector<8x64xf32>
    %cst_62 = arith.constant 0.254829586 : f32
    %182 = vector.broadcast %cst_62 : f32 to vector<8x64xf32>
    %183 = arith.addf %181, %182 : vector<8x64xf32>
    %184 = arith.mulf %183, %170 : vector<8x64xf32>
    %cst_63 = arith.constant 0.000000e+00 : f32
    %185 = vector.broadcast %cst_63 : f32 to vector<8x64xf32>
    %186 = arith.subf %185, %164 : vector<8x64xf32>
    %187 = arith.mulf %186, %164 : vector<8x64xf32>
    %188 = math.exp %187 : vector<8x64xf32>
    %189 = arith.mulf %184, %188 : vector<8x64xf32>
    %cst_64 = arith.constant 1.000000e+00 : f32
    %190 = vector.broadcast %cst_64 : f32 to vector<8x64xf32>
    %191 = arith.subf %190, %189 : vector<8x64xf32>
    %192 = arith.mulf %163, %191 : vector<8x64xf32>
    %cst_65 = arith.constant 1.000000e+00 : f32
    %193 = vector.broadcast %cst_65 : f32 to vector<8x64xf32>
    %194 = arith.addf %193, %192 : vector<8x64xf32>
    %195 = arith.mulf %156, %194 : vector<8x64xf32>
    %c0_66 = arith.constant 0 : index
    %c0_67 = arith.constant 0 : index
    %196 = vector.load %arg5[%c0_66, %c0_67] : memref<64x32xf32, #tpu.memory_space<vmem>>, vector<64x32xf32>
    %cst_68 = arith.constant dense<0.000000e+00> : vector<8x32xf32>
    %197 = tpu.matmul %195, %196, %cst_68 {dimension_numbers = #tpu.dot_dimension_numbers<[1], [0], [0], [1], [0, 0, 1, 1], [], []>} : vector<8x64xf32>, vector<64x32xf32>, vector<8x32xf32> -> vector<8x32xf32>
    %c5 = arith.constant 5 : index
    %c0_69 = arith.constant 0 : index
    %198 = vector.load %arg7[%c5, %c0_69] : memref<9x96xf32, #tpu.memory_space<vmem>>, vector<1x32xf32>
    %199 = vector.broadcast %198 : vector<1x32xf32> to vector<8x32xf32>
    %200 = arith.addf %197, %199 : vector<8x32xf32>
    %201 = tpu.concatenate %117, %200 in 1 : vector<8x32xf32>, vector<8x32xf32> -> vector<8x64xf32>
    %c0_70 = arith.constant 0 : index
    %c0_71 = arith.constant 0 : index
    %202 = vector.load %arg6[%c0_70, %c0_71] : memref<64x32xf32, #tpu.memory_space<vmem>>, vector<64x32xf32>
    %cst_72 = arith.constant dense<0.000000e+00> : vector<8x32xf32>
    %203 = tpu.matmul %201, %202, %cst_72 {dimension_numbers = #tpu.dot_dimension_numbers<[1], [0], [0], [1], [0, 0, 1, 1], [], []>} : vector<8x64xf32>, vector<64x32xf32>, vector<8x32xf32> -> vector<8x32xf32>
    %c6 = arith.constant 6 : index
    %c0_73 = arith.constant 0 : index
    %204 = vector.load %arg7[%c6, %c0_73] : memref<9x96xf32, #tpu.memory_space<vmem>>, vector<1x32xf32>
    %205 = vector.broadcast %204 : vector<1x32xf32> to vector<8x32xf32>
    %206 = arith.addf %203, %205 : vector<8x32xf32>
    %207 = arith.negf %206 : vector<8x32xf32>
    %208 = math.exp %207 : vector<8x32xf32>
    %cst_74 = arith.constant 1.000000e+00 : f32
    %209 = vector.broadcast %cst_74 : f32 to vector<8x32xf32>
    %210 = arith.addf %209, %208 : vector<8x32xf32>
    %211 = arith.divf %209, %210 : vector<8x32xf32>
    %212 = arith.mulf %211, %117 : vector<8x32xf32>
    %cst_75 = arith.constant 1.000000e+00 : f32
    %213 = vector.broadcast %cst_75 : f32 to vector<8x32xf32>
    %214 = arith.subf %213, %211 : vector<8x32xf32>
    %215 = arith.mulf %214, %200 : vector<8x32xf32>
    %216 = arith.addf %212, %215 : vector<8x32xf32>
    %217 = arith.addf %0, %216 : vector<8x32xf32>
    %c7 = arith.constant 7 : index
    %c0_76 = arith.constant 0 : index
    %218 = vector.load %arg7[%c7, %c0_76] : memref<9x96xf32, #tpu.memory_space<vmem>>, vector<1x32xf32>
    %c8 = arith.constant 8 : index
    %c0_77 = arith.constant 0 : index
    %219 = vector.load %arg7[%c8, %c0_77] : memref<9x96xf32, #tpu.memory_space<vmem>>, vector<1x32xf32>
    %cst_78 = arith.constant dense<0.000000e+00> : vector<8xf32>
    %220 = vector.multi_reduction <add>, %217, %cst_78 [1] : vector<8x32xf32> to vector<8xf32>
    %221 = vector.shape_cast %220 : vector<8xf32> to vector<8x1xf32>
    %cst_79 = arith.constant 3.200000e+01 : f32
    %222 = vector.broadcast %cst_79 : f32 to vector<8x1xf32>
    %223 = arith.divf %221, %222 : vector<8x1xf32>
    %224 = vector.broadcast %223 : vector<8x1xf32> to vector<8x32xf32>
    %225 = arith.subf %217, %224 : vector<8x32xf32>
    %226 = arith.mulf %225, %225 : vector<8x32xf32>
    %cst_80 = arith.constant dense<0.000000e+00> : vector<8xf32>
    %227 = vector.multi_reduction <add>, %226, %cst_80 [1] : vector<8x32xf32> to vector<8xf32>
    %228 = vector.shape_cast %227 : vector<8xf32> to vector<8x1xf32>
    %cst_81 = arith.constant 3.200000e+01 : f32
    %229 = vector.broadcast %cst_81 : f32 to vector<8x1xf32>
    %230 = arith.divf %228, %229 : vector<8x1xf32>
    %231 = vector.broadcast %223 : vector<8x1xf32> to vector<8x32xf32>
    %232 = arith.subf %217, %231 : vector<8x32xf32>
    %cst_82 = arith.constant 9.99999974E-6 : f32
    %233 = vector.broadcast %cst_82 : f32 to vector<8x1xf32>
    %234 = arith.addf %230, %233 : vector<8x1xf32>
    %235 = math.rsqrt %234 : vector<8x1xf32>
    %236 = vector.broadcast %235 : vector<8x1xf32> to vector<8x32xf32>
    %237 = arith.mulf %232, %236 : vector<8x32xf32>
    %238 = vector.broadcast %218 : vector<1x32xf32> to vector<8x32xf32>
    %239 = arith.mulf %237, %238 : vector<8x32xf32>
    %240 = vector.broadcast %219 : vector<1x32xf32> to vector<8x32xf32>
    %241 = arith.addf %239, %240 : vector<8x32xf32>
    %c0_83 = arith.constant 0 : index
    %c0_84 = arith.constant 0 : index
    %242 = vector.load %arg8[%c0_83, %c0_84] : memref<8x32xf32, #tpu.memory_space<vmem>>, vector<8x32xf32>
    tpu.vector_store %arg8[%c0_83, %c0_84], %241 {strides = array<i32>} : memref<8x32xf32, #tpu.memory_space<vmem>>, vector<8x32xf32>,
    return
  }
  func.func @transform_0(%arg0: i32) -> (i32, i32) {
    %c0_i32 = arith.constant 0 : i32
    %c0_i32_0 = arith.constant 0 : i32
    return %arg0, %c0_i32 : i32, i32
  }
  func.func @transform_1(%arg0: i32) -> (i32, i32) {
    %c0_i32 = arith.constant 0 : i32
    %c0_i32_0 = arith.constant 0 : i32
    %c0_i32_1 = arith.constant 0 : i32
    return %c0_i32, %c0_i32_0 : i32, i32
  }
  func.func @transform_2(%arg0: i32) -> (i32, i32) {
    %c0_i32 = arith.constant 0 : i32
    %c0_i32_0 = arith.constant 0 : i32
    %c0_i32_1 = arith.constant 0 : i32
    return %c0_i32, %c0_i32_0 : i32, i32
  }
  func.func @transform_3(%arg0: i32) -> (i32, i32) {
    %c0_i32 = arith.constant 0 : i32
    %c0_i32_0 = arith.constant 0 : i32
    %c0_i32_1 = arith.constant 0 : i32
    return %c0_i32, %c0_i32_0 : i32, i32
  }
  func.func @transform_4(%arg0: i32) -> (i32, i32) {
    %c0_i32 = arith.constant 0 : i32
    %c0_i32_0 = arith.constant 0 : i32
    %c0_i32_1 = arith.constant 0 : i32
    return %c0_i32, %c0_i32_0 : i32, i32
  }
  func.func @transform_5(%arg0: i32) -> (i32, i32) {
    %c0_i32 = arith.constant 0 : i32
    %c0_i32_0 = arith.constant 0 : i32
    %c0_i32_1 = arith.constant 0 : i32
    return %c0_i32, %c0_i32_0 : i32, i32
  }
  func.func @transform_6(%arg0: i32) -> (i32, i32) {
    %c0_i32 = arith.constant 0 : i32
    %c0_i32_0 = arith.constant 0 : i32
    %c0_i32_1 = arith.constant 0 : i32
    return %c0_i32, %c0_i32_0 : i32, i32
  }
  func.func @transform_7(%arg0: i32) -> (i32, i32) {
    %c0_i32 = arith.constant 0 : i32
    %c0_i32_0 = arith.constant 0 : i32
    return %arg0, %c0_i32 : i32, i32
  }
}

</mosaic_0001>

<llo_original>
// kernel: tpu_custom_call.1
$region0: #{tpu_custom_call.1}
  #allocation0 [shape = 'u32[]', space=smem, size = 0x4, offset = 0x4, fixed_abs, tag = 'smem constant byte address 0x4 - core index']
  #allocation1 [shape = 'u32[144,128]{1,0:T(1,128)}', space=vmem, size = 0x12000, scoped, tag = 'internal scratch']
  %s0 = inlined_call_operand.vmem [shape: f32[16,32], index: 0, kind: input, shape index: {}]
  %s1 = inlined_call_operand.vmem [shape: f32[32,96], index: 1, kind: input, shape index: {}]
  %s2 = inlined_call_operand.vmem [shape: f32[32,32], index: 2, kind: input, shape index: {}]
  %s3 = inlined_call_operand.vmem [shape: f32[96,64], index: 3, kind: input, shape index: {}]
  %s4 = inlined_call_operand.vmem [shape: f32[64,32], index: 4, kind: input, shape index: {}]
  %s5 = inlined_call_operand.vmem [shape: f32[64,32], index: 5, kind: input, shape index: {}]
  %s6 = inlined_call_operand.vmem [shape: f32[9,96], index: 6, kind: input, shape index: {}]
  %s7 = inlined_call_operand.hbm [shape: f32[16,32], index: 7, kind: output, shape index: {}]
  %s8 = sld [smem:[#allocation0]]
  $region61: #{tpu_custom_call.1} parent=0
    _
  %s10 = ssub.s32 1, %s8
  %s11 = scalar_select 0, %s10, %s8
  $region1: #{tpu_custom_call.1} parent=0
    #allocation2 [shape = 'u8[8192]{0}', space=vmem, size = 0x2000, scoped, tag = 'output window, operand 0']
    #allocation3 [shape = 's32[2]{0}', space=sflag, size = 0x8, scoped, tag = 'scoped memory for tpu_custom_call.1']
    %12 = vsyncpa [#allocation3], 0
    %s13 = scalar_lea.sflag [#allocation3], 1
    %14 = vsyncpa %s13, 0
    loop: start=0, step=1, limit=4
    $region2: #{tpu_custom_call.1} parent=1 // loop_pre_header
      _
    $region3: #{tpu_custom_call.1} parent=1 // loop_header
      %s16 = sphi 0, %s20
      %p17 = scmp.ge.s32.totalorder %s16, 4
      %s26 = sphi 0, %s28
      %s29 = sphi 0, %s26
      %s30 = sphi 0, %s29
      %s46 = sphi 0, %s30
      %s50 = sphi 0, %s50
      %s52 = sphi 0, %s50
      %s53 = sphi 0, %s52
      %s67 = sphi 0, %s53
      %s71 = sphi 0, %s71
      %s73 = sphi 0, %s71
      %s74 = sphi 0, %s73
      %s88 = sphi 0, %s74
      %s92 = sphi 0, %s92
      %s94 = sphi 0, %s92
      %s95 = sphi 0, %s94
      %s109 = sphi 0, %s95
      %s113 = sphi 0, %s113
      %s115 = sphi 0, %s113
      %s116 = sphi 0, %s115
      %s130 = sphi 0, %s116
      %s134 = sphi 0, %s134
      %s136 = sphi 0, %s134
      %s137 = sphi 0, %s136
      %s151 = sphi 0, %s137
      %s155 = sphi 0, %s155
      %s157 = sphi 0, %s155
      %s158 = sphi 0, %s157
      %s172 = sphi 0, %s158
      %s178 = sphi 0, %s180
      %s181 = sphi 0, %s178
      %s182 = sphi 0, %s181
      %s198 = sphi 0, %s182
    $region4: #{tpu_custom_call.1} parent=1 // loop_header_branch
      %19 = sbr.rel (%p17) target = $region8
    $region5: #{tpu_custom_call.1} parent=1 // loop_body
      %s21 = ssub.s32 %s16, 1
      %s22 = ssub.s32 %s16, 2
      %s23 = sadd.s32 %s16, 1
      %s24 = ssub.s32 %s16, %s23
      %p25 = scmp.eq.s32.totalorder %s24, 0
      %s27 = sadd.s32 %s26, 1
      %s28 = scalar_select %p25, %s26, %s27
      %p31 = pneg %p25
      %p32 = scmp.eq.s32.totalorder %s16, 1
      %p33 = por %p31, %p32
      %p34 = scmp.ne.s32.totalorder %s26, %s29
      %p35 = scmp.eq.s32.totalorder %s16, 0
      %p36 = por %p34, %p35
      %p37 = scmp.ne.s32.totalorder %s26, %s29
      %p38 = scmp.eq.s32.totalorder %s21, 1
      %p39 = por %p37, %p38
      %p40 = scmp.ne.s32.totalorder %s29, %s30
      %p41 = scmp.eq.s32.totalorder %s21, 0
      %p42 = por %p40, %p41
      %p43 = scmp.ne.s32.totalorder %s29, %s30
      %p44 = scmp.eq.s32.totalorder %s22, 1
      %p45 = por %p43, %p44
      %p47 = scmp.ne.s32.totalorder %s30, %s46
      %p48 = scmp.eq.s32.totalorder %s22, 0
      %p49 = por %p47, %p48
      %s51 = sadd.s32 %s50, 1
      %p54 = scmp.eq.s32.totalorder %s16, 1
      %p55 = scmp.ne.s32.totalorder %s50, %s52
      %p56 = scmp.eq.s32.totalorder %s16, 0
      %p57 = por %p55, %p56
      %p58 = scmp.ne.s32.totalorder %s50, %s52
      %p59 = scmp.eq.s32.totalorder %s21, 1
      %p60 = por %p58, %p59
      %p61 = scmp.ne.s32.totalorder %s52, %s53
      %p62 = scmp.eq.s32.totalorder %s21, 0
      %p63 = por %p61, %p62
      %p64 = scmp.ne.s32.totalorder %s52, %s53
      %p65 = scmp.eq.s32.totalorder %s22, 1
      %p66 = por %p64, %p65
      %p68 = scmp.ne.s32.totalorder %s53, %s67
      %p69 = scmp.eq.s32.totalorder %s22, 0
      %p70 = por %p68, %p69
      %s72 = sadd.s32 %s71, 1
      %p75 = scmp.eq.s32.totalorder %s16, 1
      %p76 = scmp.ne.s32.totalorder %s71, %s73
      %p77 = scmp.eq.s32.totalorder %s16, 0
      %p78 = por %p76, %p77
      %p79 = scmp.ne.s32.totalorder %s71, %s73
      %p80 = scmp.eq.s32.totalorder %s21, 1
      %p81 = por %p79, %p80
      %p82 = scmp.ne.s32.totalorder %s73, %s74
      %p83 = scmp.eq.s32.totalorder %s21, 0
      %p84 = por %p82, %p83
      %p85 = scmp.ne.s32.totalorder %s73, %s74
      %p86 = scmp.eq.s32.totalorder %s22, 1
      %p87 = por %p85, %p86
      %p89 = scmp.ne.s32.totalorder %s74, %s88
      %p90 = scmp.eq.s32.totalorder %s22, 0
      %p91 = por %p89, %p90
      %s93 = sadd.s32 %s92, 1
      %p96 = scmp.eq.s32.totalorder %s16, 1
      %p97 = scmp.ne.s32.totalorder %s92, %s94
      %p98 = scmp.eq.s32.totalorder %s16, 0
      %p99 = por %p97, %p98
      %p100 = scmp.ne.s32.totalorder %s92, %s94
      %p101 = scmp.eq.s32.totalorder %s21, 1
      %p102 = por %p100, %p101
      %p103 = scmp.ne.s32.totalorder %s94, %s95
      %p104 = scmp.eq.s32.totalorder %s21, 0
      %p105 = por %p103, %p104
      %p106 = scmp.ne.s32.totalorder %s94, %s95
      %p107 = scmp.eq.s32.totalorder %s22, 1
      %p108 = por %p106, %p107
      %p110 = scmp.ne.s32.totalorder %s95, %s109
      %p111 = scmp.eq.s32.totalorder %s22, 0
      %p112 = por %p110, %p111
      %s114 = sadd.s32 %s113, 1
      %p117 = scmp.eq.s32.totalorder %s16, 1
      %p118 = scmp.ne.s32.totalorder %s113, %s115
      %p119 = scmp.eq.s32.totalorder %s16, 0
      %p120 = por %p118, %p119
      %p121 = scmp.ne.s32.totalorder %s113, %s115
      %p122 = scmp.eq.s32.totalorder %s21, 1
      %p123 = por %p121, %p122
      %p124 = scmp.ne.s32.totalorder %s115, %s116
      %p125 = scmp.eq.s32.totalorder %s21, 0
      %p126 = por %p124, %p125
      %p127 = scmp.ne.s32.totalorder %s115, %s116
      %p128 = scmp.eq.s32.totalorder %s22, 1
      %p129 = por %p127, %p128
      %p131 = scmp.ne.s32.totalorder %s116, %s130
      %p132 = scmp.eq.s32.totalorder %s22, 0
      %p133 = por %p131, %p132
      %s135 = sadd.s32 %s134, 1
      %p138 = scmp.eq.s32.totalorder %s16, 1
      %p139 = scmp.ne.s32.totalorder %s134, %s136
      %p140 = scmp.eq.s32.totalorder %s16, 0
      %p141 = por %p139, %p140
      %p142 = scmp.ne.s32.totalorder %s134, %s136
      %p143 = scmp.eq.s32.totalorder %s21, 1
      %p144 = por %p142, %p143
      %p145 = scmp.ne.s32.totalorder %s136, %s137
      %p146 = scmp.eq.s32.totalorder %s21, 0
      %p147 = por %p145, %p146
      %p148 = scmp.ne.s32.totalorder %s136, %s137
      %p149 = scmp.eq.s32.totalorder %s22, 1
      %p150 = por %p148, %p149
      %p152 = scmp.ne.s32.totalorder %s137, %s151
      %p153 = scmp.eq.s32.totalorder %s22, 0
      %p154 = por %p152, %p153
      %s156 = sadd.s32 %s155, 1
      %p159 = scmp.eq.s32.totalorder %s16, 1
      %p160 = scmp.ne.s32.totalorder %s155, %s157
      %p161 = scmp.eq.s32.totalorder %s16, 0
      %p162 = por %p160, %p161
      %p163 = scmp.ne.s32.totalorder %s155, %s157
      %p164 = scmp.eq.s32.totalorder %s21, 1
      %p165 = por %p163, %p164
      %p166 = scmp.ne.s32.totalorder %s157, %s158
      %p167 = scmp.eq.s32.totalorder %s21, 0
      %p168 = por %p166, %p167
      %p169 = scmp.ne.s32.totalorder %s157, %s158
      %p170 = scmp.eq.s32.totalorder %s22, 1
      %p171 = por %p169, %p170
      %p173 = scmp.ne.s32.totalorder %s158, %s172
      %p174 = scmp.eq.s32.totalorder %s22, 0
      %p175 = por %p173, %p174
      %s176 = ssub.s32 %s16, %s23
      %p177 = scmp.eq.s32.totalorder %s176, 0
      %s179 = sadd.s32 %s178, 1
      %s180 = scalar_select %p177, %s178, %s179
      %p183 = pneg %p177
      %p184 = scmp.eq.s32.totalorder %s16, 1
      %p185 = por %p183, %p184
      %p186 = scmp.ne.s32.totalorder %s178, %s181
      %p187 = scmp.eq.s32.totalorder %s16, 0
      %p188 = por %p186, %p187
      %p189 = scmp.ne.s32.totalorder %s178, %s181
      %p190 = scmp.eq.s32.totalorder %s21, 1
      %p191 = por %p189, %p190
      %p192 = scmp.ne.s32.totalorder %s181, %s182
      %p193 = scmp.eq.s32.totalorder %s21, 0
      %p194 = por %p192, %p193
      %p195 = scmp.ne.s32.totalorder %s181, %s182
      %p196 = scmp.eq.s32.totalorder %s22, 1
      %p197 = por %p195, %p196
      %p199 = scmp.ne.s32.totalorder %s182, %s198
      %p200 = scmp.eq.s32.totalorder %s22, 0
      %p201 = por %p199, %p200
      %p202 = scmp.le.s32.totalorder 1, %s16
      %p203 = scmp.lt.s32.totalorder %s16, 3
      %p204 = pnand %p202, %p203
      %p205 = pneg %p204
      // Predicated region
      $region9: #{tpu_custom_call.1} parent=5 // pred_check
        _
      $region10: #{tpu_custom_call.1} parent=5 // pred_check_branch
        %207 = sbr.rel (%p204) target = $region12
      $region11: #{tpu_custom_call.1} parent=5 // pred_region
        %s208 = ssub.s32 %s16, 1
        // Predicated region
        $region13: #{tpu_custom_call.1} parent=11 // pred_check
          %p209 = pneg %p63
        $region14: #{tpu_custom_call.1} parent=11 // pred_check_branch
          %211 = sbr.rel (%p209) target = $region16
        $region15: #{tpu_custom_call.1} parent=11 // pred_region
          _
        $region16: #{tpu_custom_call.1} parent=11 // pred_fallthru
          _
        // Predicated region
        $region17: #{tpu_custom_call.1} parent=11 // pred_check
          %p212 = pneg %p84
        $region18: #{tpu_custom_call.1} parent=11 // pred_check_branch
          %214 = sbr.rel (%p212) target = $region20
        $region19: #{tpu_custom_call.1} parent=11 // pred_region
          _
        $region20: #{tpu_custom_call.1} parent=11 // pred_fallthru
          _
        // Predicated region
        $region21: #{tpu_custom_call.1} parent=11 // pred_check
          %p215 = pneg %p105
        $region22: #{tpu_custom_call.1} parent=11 // pred_check_branch
          %217 = sbr.rel (%p215) target = $region24
        $region23: #{tpu_custom_call.1} parent=11 // pred_region
          _
        $region24: #{tpu_custom_call.1} parent=11 // pred_fallthru
          _
        // Predicated region
        $region25: #{tpu_custom_call.1} parent=11 // pred_check
          %p218 = pneg %p126
        $region26: #{tpu_custom_call.1} parent=11 // pred_check_branch
          %220 = sbr.rel (%p218) target = $region28
        $region27: #{tpu_custom_call.1} parent=11 // pred_region
          _
        $region28: #{tpu_custom_call.1} parent=11 // pred_fallthru
          _
        // Predicated region
        $region29: #{tpu_custom_call.1} parent=11 // pred_check
          %p221 = pneg %p147
        $region30: #{tpu_custom_call.1} parent=11 // pred_check_branch
          %223 = sbr.rel (%p221) target = $region32
        $region31: #{tpu_custom_call.1} parent=11 // pred_region
          _
        $region32: #{tpu_custom_call.1} parent=11 // pred_fallthru
          _
        // Predicated region
        $region33: #{tpu_custom_call.1} parent=11 // pred_check
          %p224 = pneg %p168
        $region34: #{tpu_custom_call.1} parent=11 // pred_check_branch
          %226 = sbr.rel (%p224) target = $region36
        $region35: #{tpu_custom_call.1} parent=11 // pred_region
          _
        $region36: #{tpu_custom_call.1} parent=11 // pred_fallthru
          _
      $region12: #{tpu_custom_call.1} parent=5 // pred_fallthru
        _
      %p227 = scmp.lt.s32.totalorder %s16, 2
      // Predicated region
      $region37: #{tpu_custom_call.1} parent=5 // pred_check
        %p228 = pneg %p227
      $region38: #{tpu_custom_call.1} parent=5 // pred_check_branch
        %230 = sbr.rel (%p228) target = $region40
      $region39: #{tpu_custom_call.1} parent=5 // pred_region
        // Predicated region
        $region41: #{tpu_custom_call.1} parent=39 // pred_check
          %p231 = pneg %p36
        $region42: #{tpu_custom_call.1} parent=39 // pred_check_branch
          %233 = sbr.rel (%p231) target = $region44
        $region43: #{tpu_custom_call.1} parent=39 // pred_region
          %p234 = scmp.lt.s32.totalorder %s16, 1
          %s235 = scalar_select %p234, %s16, 1
          %s236 = smul.addr %s235, 8
          %s237 = scalar_lea.vmem %s0, %s236
        $region44: #{tpu_custom_call.1} parent=39 // pred_fallthru
          _
      $region40: #{tpu_custom_call.1} parent=5 // pred_fallthru
        _
      %p238 = scmp.le.s32.totalorder 1, %s16
      %p239 = scmp.lt.s32.totalorder %s16, 3
      %p240 = pnand %p238, %p239
      %p241 = pneg %p240
      // Predicated region
      $region45: #{tpu_custom_call.1} parent=5 // pred_check
        _
      $region46: #{tpu_custom_call.1} parent=5 // pred_check_branch
        %243 = sbr.rel (%p240) target = $region48
      $region47: #{tpu_custom_call.1} parent=5 // pred_region
        %s244 = ssub.s32 %s16, 1
        %p245 = scmp.lt.s32.totalorder %s21, 1
        %s246 = scalar_select %p245, %s21, 1
        %s247 = smul.addr %s246, 8
        %s248 = scalar_lea.vmem %s0, %s247
        %p249 = pneg %p42
        %p250 = pneg %p39
        %p251 = pneg %p63
        %p252 = pneg %p60
        %p253 = pneg %p84
        %p254 = pneg %p81
        %p255 = pneg %p105
        %p256 = pneg %p102
        %p257 = pneg %p126
        %p258 = pneg %p123
        %p259 = pneg %p147
        %p260 = pneg %p144
        %p261 = pneg %p168
        %p262 = pneg %p165
        %p263 = pneg %p194
        %p264 = pneg %p191
        %s265 = sand.u32 %s181, 1
        %s266 = scalar_lea.sflag [#allocation3], %s265
        %s267 = sand.u32 %s181, 1
        %s268 = smul.addr %s267, 8
        %s269 = scalar_lea.vmem [#allocation2], %s268
        %p270 = scmp.lt.s32.totalorder %s21, 1
        %s271 = scalar_select %p270, %s21, 1
        %s272 = smul.addr %s271, 8
        %s273 = scalar_lea.vmem %s0, %s272
        %v274 = vld [vmem:[%s273] sm:$0xff]
        %v275 = vld [vmem:[%s1] sm:$0xff]
        %v276 = vld [vmem:[%s1 + $0x8] sm:$0xff]
        %v277 = vld [vmem:[%s1 + $0x10] sm:$0xff]
        %v278 = vld [vmem:[%s1 + $0x18] sm:$0xff]
        %v279 = vld [vmem:[%s6] sm:$0x1]
        %v280 = vlaneseq
        %v281 = vshrl.u32 %v280, 7
        %v282 = vsub.s32 0, %v281
        %v283 = vrot.slane %v279, %v282
        %vm284 = vcmask 261120
        %v286 = vsel %vm284, %v274, 0
        %288 = vmatprep.subr.mxu0 0.0
        %289 = vmatpush1.msra.mxu0 %v275
        %290 = vmatprep.subr.mxu0 0.0
        %291 = vmatpush1.msra.mxu0 %v276
        %292 = vmatprep.subr.mxu0 0.0
        %293 = vmatpush1.msra.mxu0 %v277
        %294 = vmatprep.subr.mxu0 0.0
        %295 = vmatpush1.msra.mxu0 %v278
        %296 = vmatprep.subr.mxu0 0.0
        %297 = vmatpush1.msra.mxu0 0.0
        %298 = vmatprep.subr.mxu0 0.0
        %299 = vmatpush1.msra.mxu0 0.0
        %300 = vmatprep.subr.mxu0 0.0
        %301 = vmatpush1.msra.mxu0 0.0
        %302 = vmatprep.subr.mxu0 0.0
        %303 = vmatpush1.msra.mxu0 0.0
        %304 = vmatprep.subr.mxu0 0.0
        %305 = vmatpush1.msra.mxu0 0.0
        %306 = vmatprep.subr.mxu0 0.0
        %307 = vmatpush1.msra.mxu0 0.0
        %308 = vmatprep.subr.mxu0 0.0
        %309 = vmatpush1.msra.mxu0 0.0
        %310 = vmatprep.subr.mxu0 0.0
        %311 = vmatpush1.msra.mxu0 0.0
        %312 = vmatprep.subr.mxu0 0.0
        %313 = vmatpush1.msra.mxu0 0.0
        %314 = vmatprep.subr.mxu0 0.0
        %315 = vmatpush1.msra.mxu0 0.0
        %316 = vmatprep.subr.mxu0 0.0
        %317 = vmatpush1.msra.mxu0 0.0
        %318 = vmatprep.subr.mxu0 0.0
        %319 = vmatpush1.msra.mxu0 0.0
        %320 = vmatprep.subr.mxu0 0.0
        %321 = vmatpush1.msra.mxu0 0.0
        %322 = vmatprep.subr.mxu0 0.0
        %323 = vmatpush1.msra.mxu0 0.0
        %324 = vmatprep.subr.mxu0 0.0
        %325 = vmatpush1.msra.mxu0 0.0
        %326 = vmatprep.subr.mxu0 0.0
        %327 = vmatpush1.msra.mxu0 0.0
        %328 = vmatprep.subr.mxu0 0.0
        %329 = vmatpush1.msra.mxu0 0.0
        %330 = vmatprep.subr.mxu0 0.0
        %331 = vmatpush1.msra.mxu0 0.0
        %332 = vmatprep.subr.mxu0 0.0
        %333 = vmatpush1.msra.mxu0 0.0
        %334 = vmatprep.subr.mxu0 0.0
        %335 = vmatpush1.msra.mxu0 0.0
        %336 = vmatprep.subr.mxu0 0.0
        %337 = vmatpush1.msra.mxu0 0.0
        %338 = vmatprep.subr.mxu0 0.0
        %339 = vmatpush1.msra.mxu0 0.0
        %340 = vmatprep.subr.mxu0 0.0
        %341 = vmatpush1.msra.mxu0 0.0
        %342 = vmatprep.subr.mxu0 0.0
        %343 = vmatpush1.msra.mxu0 0.0
        %344 = vmatprep.subr.mxu0 0.0
        %345 = vmatpush1.msra.mxu0 0.0
        %346 = vmatprep.subr.mxu0 0.0
        %347 = vmatpush1.msra.mxu0 0.0
        %348 = vmatprep.subr.mxu0 0.0
        %349 = vmatpush1.msra.mxu0 0.0
        %350 = vmatprep.subr.mxu0 0.0
        %351 = vmatpush1.msra.mxu0 0.0
        %352 = vmatprep.mubr.f32.mxu0 0.0
        %353 = vmatmul.mubr.f32.gmra.mrb[0].mxu0 %v286
        %v354 = vpop.f32.mrb[0].mxu0
        %v355 = vadd.f32 %v283, %v354
        %v356 = vpop.f32.mrb[0].mxu0
        %357 = vdwg.mxu0
        %v358 = vlaneseq
        %v359 = vshrl.u32 %v358, 7
        %v360 = vlaneseq
        %v361 = vand.u32 %v360, 127
        %vm362 = vcmp.le.s32.totalorder %v361, %v359
        %v363 = vsel %vm362, 0.0, -1e+30
        %v364 = vmul.f32 %v355, 0.35355338
        %366 = vrot.lane.b32.xlu0 %v355, 96
        %v367 = vpop.permute.xlu0 %366
        %vm368 = vcmask 64512
        %v370 = vsel %vm368, %v364, 0
        %v372 = vsel %vm368, %v367, 0
        %374 = vmatprep.subr.mxu0 0.0
        %375 = vmatpush1.xpose.msra.mxu0 %v372
        %376 = vmatprep.subr.mxu0 0.0
        %377 = vmatpush1.xpose.msra.mxu0 0.0
        %378 = vmatprep.subr.mxu0 0.0
        %379 = vmatpush1.xpose.msra.mxu0 0.0
        %380 = vmatprep.subr.mxu0 0.0
        %381 = vmatpush1.xpose.msra.mxu0 0.0
        %382 = vmatprep.subr.mxu0 0.0
        %383 = vmatpush1.xpose.msra.mxu0 0.0
        %384 = vmatprep.subr.mxu0 0.0
        %385 = vmatpush1.xpose.msra.mxu0 0.0
        %386 = vmatprep.subr.mxu0 0.0
        %387 = vmatpush1.xpose.msra.mxu0 0.0
        %388 = vmatprep.subr.mxu0 0.0
        %389 = vmatpush1.xpose.msra.mxu0 0.0
        %390 = vmatprep.subr.mxu0 0.0
        %391 = vmatpush1.xpose.msra.mxu0 0.0
        %392 = vmatprep.subr.mxu0 0.0
        %393 = vmatpush1.xpose.msra.mxu0 0.0
        %394 = vmatprep.subr.mxu0 0.0
        %395 = vmatpush1.xpose.msra.mxu0 0.0
        %396 = vmatprep.subr.mxu0 0.0
        %397 = vmatpush1.xpose.msra.mxu0 0.0
        %398 = vmatprep.subr.mxu0 0.0
        %399 = vmatpush1.xpose.msra.mxu0 0.0
        %400 = vmatprep.subr.mxu0 0.0
        %401 = vmatpush1.xpose.msra.mxu0 0.0
        %402 = vmatprep.subr.mxu0 0.0
        %403 = vmatpush1.xpose.msra.mxu0 0.0
        %404 = vmatprep.subr.mxu0 0.0
        %405 = vmatpush1.xpose.msra.mxu0 0.0
        %406 = vmatprep.subr.mxu0 0.0
        %407 = vmatpush1.xpose.msra.mxu0 0.0
        %408 = vmatprep.subr.mxu0 0.0
        %409 = vmatpush1.xpose.msra.mxu0 0.0
        %410 = vmatprep.subr.mxu0 0.0
        %411 = vmatpush1.xpose.msra.mxu0 0.0
        %412 = vmatprep.subr.mxu0 0.0
        %413 = vmatpush1.xpose.msra.mxu0 0.0
        %414 = vmatprep.subr.mxu0 0.0
        %415 = vmatpush1.xpose.msra.mxu0 0.0
        %416 = vmatprep.subr.mxu0 0.0
        %417 = vmatpush1.xpose.msra.mxu0 0.0
        %418 = vmatprep.subr.mxu0 0.0
        %419 = vmatpush1.xpose.msra.mxu0 0.0
        %420 = vmatprep.subr.mxu0 0.0
        %421 = vmatpush1.xpose.msra.mxu0 0.0
        %422 = vmatprep.subr.mxu0 0.0
        %423 = vmatpush1.xpose.msra.mxu0 0.0
        %424 = vmatprep.subr.mxu0 0.0
        %425 = vmatpush1.xpose.msra.mxu0 0.0
        %426 = vmatprep.subr.mxu0 0.0
        %427 = vmatpush1.xpose.msra.mxu0 0.0
        %428 = vmatprep.subr.mxu0 0.0
        %429 = vmatpush1.xpose.msra.mxu0 0.0
        %430 = vmatprep.subr.mxu0 0.0
        %431 = vmatpush1.xpose.msra.mxu0 0.0
        %432 = vmatprep.subr.mxu0 0.0
        %433 = vmatpush1.xpose.msra.mxu0 0.0
        %434 = vmatprep.subr.mxu0 0.0
        %435 = vmatpush1.xpose.msra.mxu0 0.0
        %436 = vmatprep.subr.mxu0 0.0
        %437 = vmatpush1.xpose.msra.mxu0 0.0
        %438 = vmatprep.mubr.f32.mxu0 0.0
        %439 = vmatmul.mubr.f32.gmra.mrb[0].mxu0 %v370
        %v440 = vpop.f32.mrb[0].mxu0
        %v441 = vadd.f32 %v363, %v440
        %v442 = vpop.f32.mrb[0].mxu0
        %443 = vdwg.mxu0
        %v444 = vsel %vm368, %v441, -inf
        %445 = vmax.xlane.f32.xlu0 %v444
        %v446 = vpop.xlane.xlu0 %445
        %v447 = vsub.f32 %v441, %v446
        %v448 = vmul.f32 %v447, 1.442695
        %v449 = vpow.pop %v448
        %v450 = vsel %vm368, %v449, 0.0
        %451 = vadd.xlane.f32.xlu0 %v450
        %v452 = vpop.xlane.xlu0 %451
        %453 = vrot.lane.b32.xlu0 %v355, 64
        %v454 = vpop.permute.xlu0 %453
        %v457 = vsel %vm368, %v449, 0
        %459 = vmatprep.subr.mxu0 0.0
        %460 = vmatpush1.msra.mxu0 %v454
        %461 = vmatprep.subr.mxu0 0.0
        %462 = vmatpush1.msra.mxu0 0.0
        %463 = vmatprep.subr.mxu0 0.0
        %464 = vmatpush1.msra.mxu0 0.0
        %465 = vmatprep.subr.mxu0 0.0
        %466 = vmatpush1.msra.mxu0 0.0
        %467 = vmatprep.subr.mxu0 0.0
        %468 = vmatpush1.msra.mxu0 0.0
        %469 = vmatprep.subr.mxu0 0.0
        %470 = vmatpush1.msra.mxu0 0.0
        %471 = vmatprep.subr.mxu0 0.0
        %472 = vmatpush1.msra.mxu0 0.0
        %473 = vmatprep.subr.mxu0 0.0
        %474 = vmatpush1.msra.mxu0 0.0
        %475 = vmatprep.subr.mxu0 0.0
        %476 = vmatpush1.msra.mxu0 0.0
        %477 = vmatprep.subr.mxu0 0.0
        %478 = vmatpush1.msra.mxu0 0.0
        %479 = vmatprep.subr.mxu0 0.0
        %480 = vmatpush1.msra.mxu0 0.0
        %481 = vmatprep.subr.mxu0 0.0
        %482 = vmatpush1.msra.mxu0 0.0
        %483 = vmatprep.subr.mxu0 0.0
        %484 = vmatpush1.msra.mxu0 0.0
        %485 = vmatprep.subr.mxu0 0.0
        %486 = vmatpush1.msra.mxu0 0.0
        %487 = vmatprep.subr.mxu0 0.0
        %488 = vmatpush1.msra.mxu0 0.0
        %489 = vmatprep.subr.mxu0 0.0
        %490 = vmatpush1.msra.mxu0 0.0
        %491 = vmatprep.subr.mxu0 0.0
        %492 = vmatpush1.msra.mxu0 0.0
        %493 = vmatprep.subr.mxu0 0.0
        %494 = vmatpush1.msra.mxu0 0.0
        %495 = vmatprep.subr.mxu0 0.0
        %496 = vmatpush1.msra.mxu0 0.0
        %497 = vmatprep.subr.mxu0 0.0
        %498 = vmatpush1.msra.mxu0 0.0
        %499 = vmatprep.subr.mxu0 0.0
        %500 = vmatpush1.msra.mxu0 0.0
        %501 = vmatprep.subr.mxu0 0.0
        %502 = vmatpush1.msra.mxu0 0.0
        %503 = vmatprep.subr.mxu0 0.0
        %504 = vmatpush1.msra.mxu0 0.0
        %505 = vmatprep.subr.mxu0 0.0
        %506 = vmatpush1.msra.mxu0 0.0
        %507 = vmatprep.subr.mxu0 0.0
        %508 = vmatpush1.msra.mxu0 0.0
        %509 = vmatprep.subr.mxu0 0.0
        %510 = vmatpush1.msra.mxu0 0.0
        %511 = vmatprep.subr.mxu0 0.0
        %512 = vmatpush1.msra.mxu0 0.0
        %513 = vmatprep.subr.mxu0 0.0
        %514 = vmatpush1.msra.mxu0 0.0
        %515 = vmatprep.subr.mxu0 0.0
        %516 = vmatpush1.msra.mxu0 0.0
        %517 = vmatprep.subr.mxu0 0.0
        %518 = vmatpush1.msra.mxu0 0.0
        %519 = vmatprep.subr.mxu0 0.0
        %520 = vmatpush1.msra.mxu0 0.0
        %521 = vmatprep.subr.mxu0 0.0
        %522 = vmatpush1.msra.mxu0 0.0
        %523 = vmatprep.mubr.f32.mxu0 0.0
        %524 = vmatmul.mubr.f32.gmra.mrb[0].mxu0 %v457
        %v525 = vpop.f32.mrb[0].mxu0
        %v526 = vadd.f32 0.0, %v525
        %v527 = vpop.f32.mrb[0].mxu0
        %528 = vdwg.mxu0
        %v529 = vrcp.pop %v452
        %v530 = vmul.f32 %v526, %v529
        %531 = vrot.lane.b32.xlu0 %v364, 120
        %v532 = vpop.permute.xlu0 %531
        %533 = vrot.lane.b32.xlu0 %v355, 88
        %v534 = vpop.permute.xlu0 %533
        %v535 = vsel %vm368, %v532, 0
        %v537 = vsel %vm368, %v534, 0
        %539 = vmatprep.subr.mxu0 0.0
        %540 = vmatpush1.xpose.msra.mxu0 %v537
        %541 = vmatprep.subr.mxu0 0.0
        %542 = vmatpush1.xpose.msra.mxu0 0.0
        %543 = vmatprep.subr.mxu0 0.0
        %544 = vmatpush1.xpose.msra.mxu0 0.0
        %545 = vmatprep.subr.mxu0 0.0
        %546 = vmatpush1.xpose.msra.mxu0 0.0
        %547 = vmatprep.subr.mxu0 0.0
        %548 = vmatpush1.xpose.msra.mxu0 0.0
        %549 = vmatprep.subr.mxu0 0.0
        %550 = vmatpush1.xpose.msra.mxu0 0.0
        %551 = vmatprep.subr.mxu0 0.0
        %552 = vmatpush1.xpose.msra.mxu0 0.0
        %553 = vmatprep.subr.mxu0 0.0
        %554 = vmatpush1.xpose.msra.mxu0 0.0
        %555 = vmatprep.subr.mxu0 0.0
        %556 = vmatpush1.xpose.msra.mxu0 0.0
        %557 = vmatprep.subr.mxu0 0.0
        %558 = vmatpush1.xpose.msra.mxu0 0.0
        %559 = vmatprep.subr.mxu0 0.0
        %560 = vmatpush1.xpose.msra.mxu0 0.0
        %561 = vmatprep.subr.mxu0 0.0
        %562 = vmatpush1.xpose.msra.mxu0 0.0
        %563 = vmatprep.subr.mxu0 0.0
        %564 = vmatpush1.xpose.msra.mxu0 0.0
        %565 = vmatprep.subr.mxu0 0.0
        %566 = vmatpush1.xpose.msra.mxu0 0.0
        %567 = vmatprep.subr.mxu0 0.0
        %568 = vmatpush1.xpose.msra.mxu0 0.0
        %569 = vmatprep.subr.mxu0 0.0
        %570 = vmatpush1.xpose.msra.mxu0 0.0
        %571 = vmatprep.subr.mxu0 0.0
        %572 = vmatpush1.xpose.msra.mxu0 0.0
        %573 = vmatprep.subr.mxu0 0.0
        %574 = vmatpush1.xpose.msra.mxu0 0.0
        %575 = vmatprep.subr.mxu0 0.0
        %576 = vmatpush1.xpose.msra.mxu0 0.0
        %577 = vmatprep.subr.mxu0 0.0
        %578 = vmatpush1.xpose.msra.mxu0 0.0
        %579 = vmatprep.subr.mxu0 0.0
        %580 = vmatpush1.xpose.msra.mxu0 0.0
        %581 = vmatprep.subr.mxu0 0.0
        %582 = vmatpush1.xpose.msra.mxu0 0.0
        %583 = vmatprep.subr.mxu0 0.0
        %584 = vmatpush1.xpose.msra.mxu0 0.0
        %585 = vmatprep.subr.mxu0 0.0
        %586 = vmatpush1.xpose.msra.mxu0 0.0
        %587 = vmatprep.subr.mxu0 0.0
        %588 = vmatpush1.xpose.msra.mxu0 0.0
        %589 = vmatprep.subr.mxu0 0.0
        %590 = vmatpush1.xpose.msra.mxu0 0.0
        %591 = vmatprep.subr.mxu0 0.0
        %592 = vmatpush1.xpose.msra.mxu0 0.0
        %593 = vmatprep.subr.mxu0 0.0
        %594 = vmatpush1.xpose.msra.mxu0 0.0
        %595 = vmatprep.subr.mxu0 0.0
        %596 = vmatpush1.xpose.msra.mxu0 0.0
        %597 = vmatprep.subr.mxu0 0.0
        %598 = vmatpush1.xpose.msra.mxu0 0.0
        %599 = vmatprep.subr.mxu0 0.0
        %600 = vmatpush1.xpose.msra.mxu0 0.0
        %601 = vmatprep.subr.mxu0 0.0
        %602 = vmatpush1.xpose.msra.mxu0 0.0
        %603 = vmatprep.mubr.f32.mxu0 0.0
        %604 = vmatmul.mubr.f32.gmra.mrb[0].mxu0 %v535
        %v605 = vpop.f32.mrb[0].mxu0
        %v606 = vadd.f32 %v363, %v605
        %v607 = vpop.f32.mrb[0].mxu0
        %608 = vdwg.mxu0
        %v609 = vsel %vm368, %v606, -inf
        %610 = vmax.xlane.f32.xlu0 %v609
        %v611 = vpop.xlane.xlu0 %610
        %v612 = vsub.f32 %v606, %v611
        %v613 = vmul.f32 %v612, 1.442695
        %v614 = vpow.pop %v613
        %v615 = vsel %vm368, %v614, 0.0
        %616 = vadd.xlane.f32.xlu0 %v615
        %v617 = vpop.xlane.xlu0 %616
        %618 = vrot.lane.b32.xlu0 %v355, 56
        %v619 = vpop.permute.xlu0 %618
        %v622 = vsel %vm368, %v614, 0
        %624 = vmatprep.subr.mxu0 0.0
        %625 = vmatpush1.msra.mxu0 %v619
        %626 = vmatprep.subr.mxu0 0.0
        %627 = vmatpush1.msra.mxu0 0.0
        %628 = vmatprep.subr.mxu0 0.0
        %629 = vmatpush1.msra.mxu0 0.0
        %630 = vmatprep.subr.mxu0 0.0
        %631 = vmatpush1.msra.mxu0 0.0
        %632 = vmatprep.subr.mxu0 0.0
        %633 = vmatpush1.msra.mxu0 0.0
        %634 = vmatprep.subr.mxu0 0.0
        %635 = vmatpush1.msra.mxu0 0.0
        %636 = vmatprep.subr.mxu0 0.0
        %637 = vmatpush1.msra.mxu0 0.0
        %638 = vmatprep.subr.mxu0 0.0
        %639 = vmatpush1.msra.mxu0 0.0
        %640 = vmatprep.subr.mxu0 0.0
        %641 = vmatpush1.msra.mxu0 0.0
        %642 = vmatprep.subr.mxu0 0.0
        %643 = vmatpush1.msra.mxu0 0.0
        %644 = vmatprep.subr.mxu0 0.0
        %645 = vmatpush1.msra.mxu0 0.0
        %646 = vmatprep.subr.mxu0 0.0
        %647 = vmatpush1.msra.mxu0 0.0
        %648 = vmatprep.subr.mxu0 0.0
        %649 = vmatpush1.msra.mxu0 0.0
        %650 = vmatprep.subr.mxu0 0.0
        %651 = vmatpush1.msra.mxu0 0.0
        %652 = vmatprep.subr.mxu0 0.0
        %653 = vmatpush1.msra.mxu0 0.0
        %654 = vmatprep.subr.mxu0 0.0
        %655 = vmatpush1.msra.mxu0 0.0
        %656 = vmatprep.subr.mxu0 0.0
        %657 = vmatpush1.msra.mxu0 0.0
        %658 = vmatprep.subr.mxu0 0.0
        %659 = vmatpush1.msra.mxu0 0.0
        %660 = vmatprep.subr.mxu0 0.0
        %661 = vmatpush1.msra.mxu0 0.0
        %662 = vmatprep.subr.mxu0 0.0
        %663 = vmatpush1.msra.mxu0 0.0
        %664 = vmatprep.subr.mxu0 0.0
        %665 = vmatpush1.msra.mxu0 0.0
        %666 = vmatprep.subr.mxu0 0.0
        %667 = vmatpush1.msra.mxu0 0.0
        %668 = vmatprep.subr.mxu0 0.0
        %669 = vmatpush1.msra.mxu0 0.0
        %670 = vmatprep.subr.mxu0 0.0
        %671 = vmatpush1.msra.mxu0 0.0
        %672 = vmatprep.subr.mxu0 0.0
        %673 = vmatpush1.msra.mxu0 0.0
        %674 = vmatprep.subr.mxu0 0.0
        %675 = vmatpush1.msra.mxu0 0.0
        %676 = vmatprep.subr.mxu0 0.0
        %677 = vmatpush1.msra.mxu0 0.0
        %678 = vmatprep.subr.mxu0 0.0
        %679 = vmatpush1.msra.mxu0 0.0
        %680 = vmatprep.subr.mxu0 0.0
        %681 = vmatpush1.msra.mxu0 0.0
        %682 = vmatprep.subr.mxu0 0.0
        %683 = vmatpush1.msra.mxu0 0.0
        %684 = vmatprep.subr.mxu0 0.0
        %685 = vmatpush1.msra.mxu0 0.0
        %686 = vmatprep.subr.mxu0 0.0
        %687 = vmatpush1.msra.mxu0 0.0
        %688 = vmatprep.mubr.f32.mxu0 0.0
        %689 = vmatmul.mubr.f32.gmra.mrb[0].mxu0 %v622
        %v690 = vpop.f32.mrb[0].mxu0
        %v691 = vadd.f32 0.0, %v690
        %v692 = vpop.f32.mrb[0].mxu0
        %693 = vdwg.mxu0
        %v694 = vrcp.pop %v617
        %v695 = vmul.f32 %v691, %v694
        %696 = vrot.lane.b32.xlu0 %v364, 112
        %v697 = vpop.permute.xlu0 %696
        %698 = vrot.lane.b32.xlu0 %v355, 80
        %v699 = vpop.permute.xlu0 %698
        %v700 = vsel %vm368, %v697, 0
        %v702 = vsel %vm368, %v699, 0
        %704 = vmatprep.subr.mxu0 0.0
        %705 = vmatpush1.xpose.msra.mxu0 %v702
        %706 = vmatprep.subr.mxu0 0.0
        %707 = vmatpush1.xpose.msra.mxu0 0.0
        %708 = vmatprep.subr.mxu0 0.0
        %709 = vmatpush1.xpose.msra.mxu0 0.0
        %710 = vmatprep.subr.mxu0 0.0
        %711 = vmatpush1.xpose.msra.mxu0 0.0
        %712 = vmatprep.subr.mxu0 0.0
        %713 = vmatpush1.xpose.msra.mxu0 0.0
        %714 = vmatprep.subr.mxu0 0.0
        %715 = vmatpush1.xpose.msra.mxu0 0.0
        %716 = vmatprep.subr.mxu0 0.0
        %717 = vmatpush1.xpose.msra.mxu0 0.0
        %718 = vmatprep.subr.mxu0 0.0
        %719 = vmatpush1.xpose.msra.mxu0 0.0
        %720 = vmatprep.subr.mxu0 0.0
        %721 = vmatpush1.xpose.msra.mxu0 0.0
        %722 = vmatprep.subr.mxu0 0.0
        %723 = vmatpush1.xpose.msra.mxu0 0.0
        %724 = vmatprep.subr.mxu0 0.0
        %725 = vmatpush1.xpose.msra.mxu0 0.0
        %726 = vmatprep.subr.mxu0 0.0
        %727 = vmatpush1.xpose.msra.mxu0 0.0
        %728 = vmatprep.subr.mxu0 0.0
        %729 = vmatpush1.xpose.msra.mxu0 0.0
        %730 = vmatprep.subr.mxu0 0.0
        %731 = vmatpush1.xpose.msra.mxu0 0.0
        %732 = vmatprep.subr.mxu0 0.0
        %733 = vmatpush1.xpose.msra.mxu0 0.0
        %734 = vmatprep.subr.mxu0 0.0
        %735 = vmatpush1.xpose.msra.mxu0 0.0
        %736 = vmatprep.subr.mxu0 0.0
        %737 = vmatpush1.xpose.msra.mxu0 0.0
        %738 = vmatprep.subr.mxu0 0.0
        %739 = vmatpush1.xpose.msra.mxu0 0.0
        %740 = vmatprep.subr.mxu0 0.0
        %741 = vmatpush1.xpose.msra.mxu0 0.0
        %742 = vmatprep.subr.mxu0 0.0
        %743 = vmatpush1.xpose.msra.mxu0 0.0
        %744 = vmatprep.subr.mxu0 0.0
        %745 = vmatpush1.xpose.msra.mxu0 0.0
        %746 = vmatprep.subr.mxu0 0.0
        %747 = vmatpush1.xpose.msra.mxu0 0.0
        %748 = vmatprep.subr.mxu0 0.0
        %749 = vmatpush1.xpose.msra.mxu0 0.0
        %750 = vmatprep.subr.mxu0 0.0
        %751 = vmatpush1.xpose.msra.mxu0 0.0
        %752 = vmatprep.subr.mxu0 0.0
        %753 = vmatpush1.xpose.msra.mxu0 0.0
        %754 = vmatprep.subr.mxu0 0.0
        %755 = vmatpush1.xpose.msra.mxu0 0.0
        %756 = vmatprep.subr.mxu0 0.0
        %757 = vmatpush1.xpose.msra.mxu0 0.0
        %758 = vmatprep.subr.mxu0 0.0
        %759 = vmatpush1.xpose.msra.mxu0 0.0
        %760 = vmatprep.subr.mxu0 0.0
        %761 = vmatpush1.xpose.msra.mxu0 0.0
        %762 = vmatprep.subr.mxu0 0.0
        %763 = vmatpush1.xpose.msra.mxu0 0.0
        %764 = vmatprep.subr.mxu0 0.0
        %765 = vmatpush1.xpose.msra.mxu0 0.0
        %766 = vmatprep.subr.mxu0 0.0
        %767 = vmatpush1.xpose.msra.mxu0 0.0
        %768 = vmatprep.mubr.f32.mxu0 0.0
        %769 = vmatmul.mubr.f32.gmra.mrb[0].mxu0 %v700
        %v770 = vpop.f32.mrb[0].mxu0
        %v771 = vadd.f32 %v363, %v770
        %v772 = vpop.f32.mrb[0].mxu0
        %773 = vdwg.mxu0
        %v774 = vsel %vm368, %v771, -inf
        %775 = vmax.xlane.f32.xlu0 %v774
        %v776 = vpop.xlane.xlu0 %775
        %v777 = vsub.f32 %v771, %v776
        %v778 = vmul.f32 %v777, 1.442695
        %v779 = vpow.pop %v778
        %v780 = vsel %vm368, %v779, 0.0
        %781 = vadd.xlane.f32.xlu0 %v780
        %v782 = vpop.xlane.xlu0 %781
        %783 = vrot.lane.b32.xlu0 %v355, 48
        %v784 = vpop.permute.xlu0 %783
        %v787 = vsel %vm368, %v779, 0
        %789 = vmatprep.subr.mxu0 0.0
        %790 = vmatpush1.msra.mxu0 %v784
        %791 = vmatprep.subr.mxu0 0.0
        %792 = vmatpush1.msra.mxu0 0.0
        %793 = vmatprep.subr.mxu0 0.0
        %794 = vmatpush1.msra.mxu0 0.0
        %795 = vmatprep.subr.mxu0 0.0
        %796 = vmatpush1.msra.mxu0 0.0
        %797 = vmatprep.subr.mxu0 0.0
        %798 = vmatpush1.msra.mxu0 0.0
        %799 = vmatprep.subr.mxu0 0.0
        %800 = vmatpush1.msra.mxu0 0.0
        %801 = vmatprep.subr.mxu0 0.0
        %802 = vmatpush1.msra.mxu0 0.0
        %803 = vmatprep.subr.mxu0 0.0
        %804 = vmatpush1.msra.mxu0 0.0
        %805 = vmatprep.subr.mxu0 0.0
        %806 = vmatpush1.msra.mxu0 0.0
        %807 = vmatprep.subr.mxu0 0.0
        %808 = vmatpush1.msra.mxu0 0.0
        %809 = vmatprep.subr.mxu0 0.0
        %810 = vmatpush1.msra.mxu0 0.0
        %811 = vmatprep.subr.mxu0 0.0
        %812 = vmatpush1.msra.mxu0 0.0
        %813 = vmatprep.subr.mxu0 0.0
        %814 = vmatpush1.msra.mxu0 0.0
        %815 = vmatprep.subr.mxu0 0.0
        %816 = vmatpush1.msra.mxu0 0.0
        %817 = vmatprep.subr.mxu0 0.0
        %818 = vmatpush1.msra.mxu0 0.0
        %819 = vmatprep.subr.mxu0 0.0
        %820 = vmatpush1.msra.mxu0 0.0
        %821 = vmatprep.subr.mxu0 0.0
        %822 = vmatpush1.msra.mxu0 0.0
        %823 = vmatprep.subr.mxu0 0.0
        %824 = vmatpush1.msra.mxu0 0.0
        %825 = vmatprep.subr.mxu0 0.0
        %826 = vmatpush1.msra.mxu0 0.0
        %827 = vmatprep.subr.mxu0 0.0
        %828 = vmatpush1.msra.mxu0 0.0
        %829 = vmatprep.subr.mxu0 0.0
        %830 = vmatpush1.msra.mxu0 0.0
        %831 = vmatprep.subr.mxu0 0.0
        %832 = vmatpush1.msra.mxu0 0.0
        %833 = vmatprep.subr.mxu0 0.0
        %834 = vmatpush1.msra.mxu0 0.0
        %835 = vmatprep.subr.mxu0 0.0
        %836 = vmatpush1.msra.mxu0 0.0
        %837 = vmatprep.subr.mxu0 0.0
        %838 = vmatpush1.msra.mxu0 0.0
        %839 = vmatprep.subr.mxu0 0.0
        %840 = vmatpush1.msra.mxu0 0.0
        %841 = vmatprep.subr.mxu0 0.0
        %842 = vmatpush1.msra.mxu0 0.0
        %843 = vmatprep.subr.mxu0 0.0
        %844 = vmatpush1.msra.mxu0 0.0
        %845 = vmatprep.subr.mxu0 0.0
        %846 = vmatpush1.msra.mxu0 0.0
        %847 = vmatprep.subr.mxu0 0.0
        %848 = vmatpush1.msra.mxu0 0.0
        %849 = vmatprep.subr.mxu0 0.0
        %850 = vmatpush1.msra.mxu0 0.0
        %851 = vmatprep.subr.mxu0 0.0
        %852 = vmatpush1.msra.mxu0 0.0
        %853 = vmatprep.mubr.f32.mxu0 0.0
        %854 = vmatmul.mubr.f32.gmra.mrb[0].mxu0 %v787
        %v855 = vpop.f32.mrb[0].mxu0
        %v856 = vadd.f32 0.0, %v855
        %v857 = vpop.f32.mrb[0].mxu0
        %858 = vdwg.mxu0
        %v859 = vrcp.pop %v782
        %v860 = vmul.f32 %v856, %v859
        %861 = vrot.lane.b32.xlu0 %v364, 104
        %v862 = vpop.permute.xlu0 %861
        %863 = vrot.lane.b32.xlu0 %v355, 72
        %v864 = vpop.permute.xlu0 %863
        %v865 = vsel %vm368, %v862, 0
        %v867 = vsel %vm368, %v864, 0
        %869 = vmatprep.subr.mxu0 0.0
        %870 = vmatpush1.xpose.msra.mxu0 %v867
        %871 = vmatprep.subr.mxu0 0.0
        %872 = vmatpush1.xpose.msra.mxu0 0.0
        %873 = vmatprep.subr.mxu0 0.0
        %874 = vmatpush1.xpose.msra.mxu0 0.0
        %875 = vmatprep.subr.mxu0 0.0
        %876 = vmatpush1.xpose.msra.mxu0 0.0
        %877 = vmatprep.subr.mxu0 0.0
        %878 = vmatpush1.xpose.msra.mxu0 0.0
        %879 = vmatprep.subr.mxu0 0.0
        %880 = vmatpush1.xpose.msra.mxu0 0.0
        %881 = vmatprep.subr.mxu0 0.0
        %882 = vmatpush1.xpose.msra.mxu0 0.0
        %883 = vmatprep.subr.mxu0 0.0
        %884 = vmatpush1.xpose.msra.mxu0 0.0
        %885 = vmatprep.subr.mxu0 0.0
        %886 = vmatpush1.xpose.msra.mxu0 0.0
        %887 = vmatprep.subr.mxu0 0.0
        %888 = vmatpush1.xpose.msra.mxu0 0.0
        %889 = vmatprep.subr.mxu0 0.0
        %890 = vmatpush1.xpose.msra.mxu0 0.0
        %891 = vmatprep.subr.mxu0 0.0
        %892 = vmatpush1.xpose.msra.mxu0 0.0
        %893 = vmatprep.subr.mxu0 0.0
        %894 = vmatpush1.xpose.msra.mxu0 0.0
        %895 = vmatprep.subr.mxu0 0.0
        %896 = vmatpush1.xpose.msra.mxu0 0.0
        %897 = vmatprep.subr.mxu0 0.0
        %898 = vmatpush1.xpose.msra.mxu0 0.0
        %899 = vmatprep.subr.mxu0 0.0
        %900 = vmatpush1.xpose.msra.mxu0 0.0
        %901 = vmatprep.subr.mxu0 0.0
        %902 = vmatpush1.xpose.msra.mxu0 0.0
        %903 = vmatprep.subr.mxu0 0.0
        %904 = vmatpush1.xpose.msra.mxu0 0.0
        %905 = vmatprep.subr.mxu0 0.0
        %906 = vmatpush1.xpose.msra.mxu0 0.0
        %907 = vmatprep.subr.mxu0 0.0
        %908 = vmatpush1.xpose.msra.mxu0 0.0
        %909 = vmatprep.subr.mxu0 0.0
        %910 = vmatpush1.xpose.msra.mxu0 0.0
        %911 = vmatprep.subr.mxu0 0.0
        %912 = vmatpush1.xpose.msra.mxu0 0.0
        %913 = vmatprep.subr.mxu0 0.0
        %914 = vmatpush1.xpose.msra.mxu0 0.0
        %915 = vmatprep.subr.mxu0 0.0
        %916 = vmatpush1.xpose.msra.mxu0 0.0
        %917 = vmatprep.subr.mxu0 0.0
        %918 = vmatpush1.xpose.msra.mxu0 0.0
        %919 = vmatprep.subr.mxu0 0.0
        %920 = vmatpush1.xpose.msra.mxu0 0.0
        %921 = vmatprep.subr.mxu0 0.0
        %922 = vmatpush1.xpose.msra.mxu0 0.0
        %923 = vmatprep.subr.mxu0 0.0
        %924 = vmatpush1.xpose.msra.mxu0 0.0
        %925 = vmatprep.subr.mxu0 0.0
        %926 = vmatpush1.xpose.msra.mxu0 0.0
        %927 = vmatprep.subr.mxu0 0.0
        %928 = vmatpush1.xpose.msra.mxu0 0.0
        %929 = vmatprep.subr.mxu0 0.0
        %930 = vmatpush1.xpose.msra.mxu0 0.0
        %931 = vmatprep.subr.mxu0 0.0
        %932 = vmatpush1.xpose.msra.mxu0 0.0
        %933 = vmatprep.mubr.f32.mxu0 0.0
        %934 = vmatmul.mubr.f32.gmra.mrb[0].mxu0 %v865
        %v935 = vpop.f32.mrb[0].mxu0
        %v936 = vadd.f32 %v363, %v935
        %v937 = vpop.f32.mrb[0].mxu0
        %938 = vdwg.mxu0
        %v939 = vsel %vm368, %v936, -inf
        %940 = vmax.xlane.f32.xlu0 %v939
        %v941 = vpop.xlane.xlu0 %940
        %v942 = vsub.f32 %v936, %v941
        %v943 = vmul.f32 %v942, 1.442695
        %v944 = vpow.pop %v943
        %v945 = vsel %vm368, %v944, 0.0
        %946 = vadd.xlane.f32.xlu0 %v945
        %v947 = vpop.xlane.xlu0 %946
        %948 = vrot.lane.b32.xlu0 %v355, 40
        %v949 = vpop.permute.xlu0 %948
        %v952 = vsel %vm368, %v944, 0
        %954 = vmatprep.subr.mxu0 0.0
        %955 = vmatpush1.msra.mxu0 %v949
        %956 = vmatprep.subr.mxu0 0.0
        %957 = vmatpush1.msra.mxu0 0.0
        %958 = vmatprep.subr.mxu0 0.0
        %959 = vmatpush1.msra.mxu0 0.0
        %960 = vmatprep.subr.mxu0 0.0
        %961 = vmatpush1.msra.mxu0 0.0
        %962 = vmatprep.subr.mxu0 0.0
        %963 = vmatpush1.msra.mxu0 0.0
        %964 = vmatprep.subr.mxu0 0.0
        %965 = vmatpush1.msra.mxu0 0.0
        %966 = vmatprep.subr.mxu0 0.0
        %967 = vmatpush1.msra.mxu0 0.0
        %968 = vmatprep.subr.mxu0 0.0
        %969 = vmatpush1.msra.mxu0 0.0
        %970 = vmatprep.subr.mxu0 0.0
        %971 = vmatpush1.msra.mxu0 0.0
        %972 = vmatprep.subr.mxu0 0.0
        %973 = vmatpush1.msra.mxu0 0.0
        %974 = vmatprep.subr.mxu0 0.0
        %975 = vmatpush1.msra.mxu0 0.0
        %976 = vmatprep.subr.mxu0 0.0
        %977 = vmatpush1.msra.mxu0 0.0
        %978 = vmatprep.subr.mxu0 0.0
        %979 = vmatpush1.msra.mxu0 0.0
        %980 = vmatprep.subr.mxu0 0.0
        %981 = vmatpush1.msra.mxu0 0.0
        %982 = vmatprep.subr.mxu0 0.0
        %983 = vmatpush1.msra.mxu0 0.0
        %984 = vmatprep.subr.mxu0 0.0
        %985 = vmatpush1.msra.mxu0 0.0
        %986 = vmatprep.subr.mxu0 0.0
        %987 = vmatpush1.msra.mxu0 0.0
        %988 = vmatprep.subr.mxu0 0.0
        %989 = vmatpush1.msra.mxu0 0.0
        %990 = vmatprep.subr.mxu0 0.0
        %991 = vmatpush1.msra.mxu0 0.0
        %992 = vmatprep.subr.mxu0 0.0
        %993 = vmatpush1.msra.mxu0 0.0
        %994 = vmatprep.subr.mxu0 0.0
        %995 = vmatpush1.msra.mxu0 0.0
        %996 = vmatprep.subr.mxu0 0.0
        %997 = vmatpush1.msra.mxu0 0.0
        %998 = vmatprep.subr.mxu0 0.0
        %999 = vmatpush1.msra.mxu0 0.0
        %1000 = vmatprep.subr.mxu0 0.0
        %1001 = vmatpush1.msra.mxu0 0.0
        %1002 = vmatprep.subr.mxu0 0.0
        %1003 = vmatpush1.msra.mxu0 0.0
        %1004 = vmatprep.subr.mxu0 0.0
        %1005 = vmatpush1.msra.mxu0 0.0
        %1006 = vmatprep.subr.mxu0 0.0
        %1007 = vmatpush1.msra.mxu0 0.0
        %1008 = vmatprep.subr.mxu0 0.0
        %1009 = vmatpush1.msra.mxu0 0.0
        %1010 = vmatprep.subr.mxu0 0.0
        %1011 = vmatpush1.msra.mxu0 0.0
        %1012 = vmatprep.subr.mxu0 0.0
        %1013 = vmatpush1.msra.mxu0 0.0
        %1014 = vmatprep.subr.mxu0 0.0
        %1015 = vmatpush1.msra.mxu0 0.0
        %1016 = vmatprep.subr.mxu0 0.0
        %1017 = vmatpush1.msra.mxu0 0.0
        %1018 = vmatprep.mubr.f32.mxu0 0.0
        %1019 = vmatmul.mubr.f32.gmra.mrb[0].mxu0 %v952
        %v1020 = vpop.f32.mrb[0].mxu0
        %v1021 = vadd.f32 0.0, %v1020
        %v1022 = vpop.f32.mrb[0].mxu0
        %1023 = vdwg.mxu0
        %v1024 = vrcp.pop %v947
        %v1025 = vmul.f32 %v1021, %v1024
        %1027 = vrot.lane.b32.xlu0 %v695, 8
        %v1028 = vpop.permute.xlu0 %1027
        %1031 = vrot.lane.b32.xlu0 %v860, 16
        %v1032 = vpop.permute.xlu0 %1031
        %1035 = vrot.lane.b32.xlu0 %v1025, 24
        %v1036 = vpop.permute.xlu0 %1035
        %v1038 = vsel %vm368, %v530, %v1028
        %vm1039 = vcmask 130048
        %v1040 = vsel %vm1039, %v1038, %v1032
        %vm1041 = vcmask 195584
        %v1042 = vsel %vm1041, %v1040, %v1036
        %v1043 = vld [vmem:[%s2] sm:$0xff]
        %v1044 = vld [vmem:[%s2 + $0x8] sm:$0xff]
        %v1045 = vld [vmem:[%s2 + $0x10] sm:$0xff]
        %v1046 = vld [vmem:[%s2 + $0x18] sm:$0xff]
        %v1047 = vld [vmem:[%s6 + $0x1] sm:$0x1]
        %v1048 = vlaneseq
        %v1049 = vshrl.u32 %v1048, 7
        %v1050 = vsub.s32 0, %v1049
        %v1051 = vrot.slane %v1047, %v1050
        %v1053 = vsel %vm284, %v1042, 0
        %1055 = vmatprep.subr.mxu0 0.0
        %1056 = vmatpush1.msra.mxu0 %v1043
        %1057 = vmatprep.subr.mxu0 0.0
        %1058 = vmatpush1.msra.mxu0 %v1044
        %1059 = vmatprep.subr.mxu0 0.0
        %1060 = vmatpush1.msra.mxu0 %v1045
        %1061 = vmatprep.subr.mxu0 0.0
        %1062 = vmatpush1.msra.mxu0 %v1046
        %1063 = vmatprep.subr.mxu0 0.0
        %1064 = vmatpush1.msra.mxu0 0.0
        %1065 = vmatprep.subr.mxu0 0.0
        %1066 = vmatpush1.msra.mxu0 0.0
        %1067 = vmatprep.subr.mxu0 0.0
        %1068 = vmatpush1.msra.mxu0 0.0
        %1069 = vmatprep.subr.mxu0 0.0
        %1070 = vmatpush1.msra.mxu0 0.0
        %1071 = vmatprep.subr.mxu0 0.0
        %1072 = vmatpush1.msra.mxu0 0.0
        %1073 = vmatprep.subr.mxu0 0.0
        %1074 = vmatpush1.msra.mxu0 0.0
        %1075 = vmatprep.subr.mxu0 0.0
        %1076 = vmatpush1.msra.mxu0 0.0
        %1077 = vmatprep.subr.mxu0 0.0
        %1078 = vmatpush1.msra.mxu0 0.0
        %1079 = vmatprep.subr.mxu0 0.0
        %1080 = vmatpush1.msra.mxu0 0.0
        %1081 = vmatprep.subr.mxu0 0.0
        %1082 = vmatpush1.msra.mxu0 0.0
        %1083 = vmatprep.subr.mxu0 0.0
        %1084 = vmatpush1.msra.mxu0 0.0
        %1085 = vmatprep.subr.mxu0 0.0
        %1086 = vmatpush1.msra.mxu0 0.0
        %1087 = vmatprep.subr.mxu0 0.0
        %1088 = vmatpush1.msra.mxu0 0.0
        %1089 = vmatprep.subr.mxu0 0.0
        %1090 = vmatpush1.msra.mxu0 0.0
        %1091 = vmatprep.subr.mxu0 0.0
        %1092 = vmatpush1.msra.mxu0 0.0
        %1093 = vmatprep.subr.mxu0 0.0
        %1094 = vmatpush1.msra.mxu0 0.0
        %1095 = vmatprep.subr.mxu0 0.0
        %1096 = vmatpush1.msra.mxu0 0.0
        %1097 = vmatprep.subr.mxu0 0.0
        %1098 = vmatpush1.msra.mxu0 0.0
        %1099 = vmatprep.subr.mxu0 0.0
        %1100 = vmatpush1.msra.mxu0 0.0
        %1101 = vmatprep.subr.mxu0 0.0
        %1102 = vmatpush1.msra.mxu0 0.0
        %1103 = vmatprep.subr.mxu0 0.0
        %1104 = vmatpush1.msra.mxu0 0.0
        %1105 = vmatprep.subr.mxu0 0.0
        %1106 = vmatpush1.msra.mxu0 0.0
        %1107 = vmatprep.subr.mxu0 0.0
        %1108 = vmatpush1.msra.mxu0 0.0
        %1109 = vmatprep.subr.mxu0 0.0
        %1110 = vmatpush1.msra.mxu0 0.0
        %1111 = vmatprep.subr.mxu0 0.0
        %1112 = vmatpush1.msra.mxu0 0.0
        %1113 = vmatprep.subr.mxu0 0.0
        %1114 = vmatpush1.msra.mxu0 0.0
        %1115 = vmatprep.subr.mxu0 0.0
        %1116 = vmatpush1.msra.mxu0 0.0
        %1117 = vmatprep.subr.mxu0 0.0
        %1118 = vmatpush1.msra.mxu0 0.0
        %1119 = vmatprep.mubr.f32.mxu0 0.0
        %1120 = vmatmul.mubr.f32.gmra.mrb[0].mxu0 %v1053
        %v1121 = vpop.f32.mrb[0].mxu0
        %v1122 = vadd.f32 %v1051, %v1121
        %v1123 = vpop.f32.mrb[0].mxu0
        %1124 = vdwg.mxu0
        %v1125 = vadd.f32 %v274, %v1122
        %v1126 = vld [vmem:[%s6 + $0x2] sm:$0x1]
        %v1127 = vld [vmem:[%s6 + $0x3] sm:$0x1]
        %v1128 = vsel %vm284, %v1125, 0.0
        %1129 = vadd.xlane.f32.xlu0 %v1128
        %v1130 = vpop.xlane.xlu0 %1129
        %v1131 = vrcp.pop 32.0
        %v1132 = vmul.f32 %v1130, %v1131
        %v1133 = vsub.f32 %v1125, %v1132
        %v1134 = vmul.f32 %v1133, %v1133
        %v1135 = vsel %vm284, %v1134, 0.0
        %1136 = vadd.xlane.f32.xlu0 %v1135
        %v1137 = vpop.xlane.xlu0 %1136
        %v1138 = vmul.f32 %v1137, %v1131
        %v1139 = vadd.f32 %v1138, 1e-05
        %v1140 = vrsqrt.pop %v1139
        %v1141 = vmul.f32 %v1133, %v1140
        %v1142 = vlaneseq
        %v1143 = vshrl.u32 %v1142, 7
        %v1144 = vsub.s32 0, %v1143
        %v1145 = vrot.slane %v1126, %v1144
        %v1146 = vmul.f32 %v1141, %v1145
        %v1147 = vlaneseq
        %v1148 = vshrl.u32 %v1147, 7
        %v1149 = vsub.s32 0, %v1148
        %v1150 = vrot.slane %v1127, %v1149
        %v1151 = vadd.f32 %v1146, %v1150
        %vm1152 = vcmp.lt.s32.totalorder %v359, 0
        %v1153 = vsub.s32 0, %v359
        %v1154 = vsel %vm1152, %v1153, %v359
        %v1155 = vshrl.u32 %v1154, 3
        %v1156 = vand.u32 %v1154, 7
        %v1157 = vsub.s32 0, %v1156
        %v1158 = vsel %vm1152, %v1157, %v1156
        %vm1159 = vcmp.ne.s32.totalorder %v1158, 0
        %vm1160 = vcmp.lt.s32.totalorder %v1158, 0
        %vm1161 = vmand %vm1160, %vm1159
        %v1162 = vadd.s32 %v1158, 8
        %v1163 = vsel %vm1161, %v1162, %v1158
        %v1164 = vrot.slane %v1151, 7
        %vm1165 = vcmp.ge.s32.totalorder %v1163, 1
        %v1166 = vsel %vm1165, 1, 0
        %vm1167 = vcmp.eq.s32.totalorder %v1166, 1
        %v1168 = vsel %vm1167, %v1164, 0.0
        %v1169 = vrot.slane %v1151, 6
        %vm1170 = vcmp.ge.s32.totalorder %v1163, 2
        %v1171 = vsel %vm1170, 1, 0
        %vm1172 = vcmp.eq.s32.totalorder %v1171, 1
        %v1173 = vsel %vm1172, %v1169, 0.0
        %1175 = vrot.lane.b32.xlu0 %v1168, 32
        %v1176 = vpop.permute.xlu0 %1175
        %1179 = vrot.lane.b32.xlu0 %v1173, 64
        %v1180 = vpop.permute.xlu0 %1179
        %v1182 = vsel %vm284, %v1151, %v1176
        %vm1183 = vcmask 523264
        %v1184 = vsel %vm1183, %v1182, %v1180
        %v1185 = vld [vmem:[%s3] sm:$0xff]
        %v1186 = vld [vmem:[%s3 + $0x8] sm:$0xff]
        %v1187 = vld [vmem:[%s3 + $0x10] sm:$0xff]
        %v1188 = vld [vmem:[%s3 + $0x18] sm:$0xff]
        %v1189 = vld [vmem:[%s3 + $0x20] sm:$0xff]
        %v1190 = vld [vmem:[%s3 + $0x28] sm:$0xff]
        %v1191 = vld [vmem:[%s3 + $0x30] sm:$0xff]
        %v1192 = vld [vmem:[%s3 + $0x38] sm:$0xff]
        %v1193 = vld [vmem:[%s3 + $0x40] sm:$0xff]
        %v1194 = vld [vmem:[%s3 + $0x48] sm:$0xff]
        %v1195 = vld [vmem:[%s3 + $0x50] sm:$0xff]
        %v1196 = vld [vmem:[%s3 + $0x58] sm:$0xff]
        %v1197 = vld [vmem:[%s6 + $0x4] sm:$0x1]
        %v1198 = vlaneseq
        %v1199 = vshrl.u32 %v1198, 7
        %v1200 = vsub.s32 0, %v1199
        %v1201 = vrot.slane %v1197, %v1200
        %vm1202 = vcmask 785408
        %v1204 = vsel %vm1202, %v1184, 0
        %1206 = vmatprep.subr.mxu0 0.0
        %1207 = vmatpush1.msra.mxu0 %v1185
        %1208 = vmatprep.subr.mxu0 0.0
        %1209 = vmatpush1.msra.mxu0 %v1186
        %1210 = vmatprep.subr.mxu0 0.0
        %1211 = vmatpush1.msra.mxu0 %v1187
        %1212 = vmatprep.subr.mxu0 0.0
        %1213 = vmatpush1.msra.mxu0 %v1188
        %1214 = vmatprep.subr.mxu0 0.0
        %1215 = vmatpush1.msra.mxu0 %v1189
        %1216 = vmatprep.subr.mxu0 0.0
        %1217 = vmatpush1.msra.mxu0 %v1190
        %1218 = vmatprep.subr.mxu0 0.0
        %1219 = vmatpush1.msra.mxu0 %v1191
        %1220 = vmatprep.subr.mxu0 0.0
        %1221 = vmatpush1.msra.mxu0 %v1192
        %1222 = vmatprep.subr.mxu0 0.0
        %1223 = vmatpush1.msra.mxu0 %v1193
        %1224 = vmatprep.subr.mxu0 0.0
        %1225 = vmatpush1.msra.mxu0 %v1194
        %1226 = vmatprep.subr.mxu0 0.0
        %1227 = vmatpush1.msra.mxu0 %v1195
        %1228 = vmatprep.subr.mxu0 0.0
        %1229 = vmatpush1.msra.mxu0 %v1196
        %1230 = vmatprep.subr.mxu0 0.0
        %1231 = vmatpush1.msra.mxu0 0.0
        %1232 = vmatprep.subr.mxu0 0.0
        %1233 = vmatpush1.msra.mxu0 0.0
        %1234 = vmatprep.subr.mxu0 0.0
        %1235 = vmatpush1.msra.mxu0 0.0
        %1236 = vmatprep.subr.mxu0 0.0
        %1237 = vmatpush1.msra.mxu0 0.0
        %1238 = vmatprep.subr.mxu0 0.0
        %1239 = vmatpush1.msra.mxu0 0.0
        %1240 = vmatprep.subr.mxu0 0.0
        %1241 = vmatpush1.msra.mxu0 0.0
        %1242 = vmatprep.subr.mxu0 0.0
        %1243 = vmatpush1.msra.mxu0 0.0
        %1244 = vmatprep.subr.mxu0 0.0
        %1245 = vmatpush1.msra.mxu0 0.0
        %1246 = vmatprep.subr.mxu0 0.0
        %1247 = vmatpush1.msra.mxu0 0.0
        %1248 = vmatprep.subr.mxu0 0.0
        %1249 = vmatpush1.msra.mxu0 0.0
        %1250 = vmatprep.subr.mxu0 0.0
        %1251 = vmatpush1.msra.mxu0 0.0
        %1252 = vmatprep.subr.mxu0 0.0
        %1253 = vmatpush1.msra.mxu0 0.0
        %1254 = vmatprep.subr.mxu0 0.0
        %1255 = vmatpush1.msra.mxu0 0.0
        %1256 = vmatprep.subr.mxu0 0.0
        %1257 = vmatpush1.msra.mxu0 0.0
        %1258 = vmatprep.subr.mxu0 0.0
        %1259 = vmatpush1.msra.mxu0 0.0
        %1260 = vmatprep.subr.mxu0 0.0
        %1261 = vmatpush1.msra.mxu0 0.0
        %1262 = vmatprep.subr.mxu0 0.0
        %1263 = vmatpush1.msra.mxu0 0.0
        %1264 = vmatprep.subr.mxu0 0.0
        %1265 = vmatpush1.msra.mxu0 0.0
        %1266 = vmatprep.subr.mxu0 0.0
        %1267 = vmatpush1.msra.mxu0 0.0
        %1268 = vmatprep.subr.mxu0 0.0
        %1269 = vmatpush1.msra.mxu0 0.0
        %1270 = vmatprep.mubr.f32.mxu0 0.0
        %1271 = vmatmul.mubr.f32.gmra.mrb[0].mxu0 %v1204
        %v1272 = vpop.f32.mrb[0].mxu0
        %v1273 = vadd.f32 %v1201, %v1272
        %v1274 = vpop.f32.mrb[0].mxu0
        %1275 = vdwg.mxu0
        %v1276 = vmul.f32 %v1273, 0.5
        %v1277 = vmul.f32 %v1273, 0.70710677
        %vm1278 = vcmp.ge.f32.partialorder %v1277, 0.0
        %v1279 = vsel %vm1278, 1.0, -1.0
        %v1280 = vand.u32 2147483647, %v1277
        %v1281 = vmul.f32 %v1280, 0.3275911
        %v1282 = vadd.f32 %v1281, 1.0
        %v1283 = vrcp.pop %v1282
        %v1284 = vmul.f32 1.0, %v1283
        %v1285 = vmul.f32 %v1284, 1.0614054
        %v1286 = vadd.f32 %v1285, -1.4531521
        %v1287 = vmul.f32 %v1286, %v1284
        %v1288 = vadd.f32 %v1287, 1.4214138
        %v1289 = vmul.f32 %v1288, %v1284
        %v1290 = vadd.f32 %v1289, -0.28449672
        %v1291 = vmul.f32 %v1290, %v1284
        %v1292 = vadd.f32 %v1291, 0.2548296
        %v1293 = vmul.f32 %v1292, %v1284
        %v1294 = vsub.f32 0.0, %v1280
        %v1295 = vmul.f32 %v1294, %v1280
        %v1296 = vmul.f32 %v1295, 1.442695
        %v1297 = vpow.pop %v1296
        %v1298 = vmul.f32 %v1293, %v1297
        %v1299 = vsub.f32 1.0, %v1298
        %v1300 = vmul.f32 %v1279, %v1299
        %v1301 = vadd.f32 %v1300, 1.0
        %v1302 = vmul.f32 %v1276, %v1301
        %v1303 = vld [vmem:[%s4] sm:$0xff]
        %v1304 = vld [vmem:[%s4 + $0x8] sm:$0xff]
        %v1305 = vld [vmem:[%s4 + $0x10] sm:$0xff]
        %v1306 = vld [vmem:[%s4 + $0x18] sm:$0xff]
        %v1307 = vld [vmem:[%s4 + $0x20] sm:$0xff]
        %v1308 = vld [vmem:[%s4 + $0x28] sm:$0xff]
        %v1309 = vld [vmem:[%s4 + $0x30] sm:$0xff]
        %v1310 = vld [vmem:[%s4 + $0x38] sm:$0xff]
        %v1311 = vld [vmem:[%s6 + $0x5] sm:$0x1]
        %v1312 = vlaneseq
        %v1313 = vshrl.u32 %v1312, 7
        %v1314 = vsub.s32 0, %v1313
        %v1315 = vrot.slane %v1311, %v1314
        %v1317 = vsel %vm1183, %v1302, 0
        %1319 = vmatprep.subr.mxu0 0.0
        %1320 = vmatpush1.msra.mxu0 %v1303
        %1321 = vmatprep.subr.mxu0 0.0
        %1322 = vmatpush1.msra.mxu0 %v1304
        %1323 = vmatprep.subr.mxu0 0.0
        %1324 = vmatpush1.msra.mxu0 %v1305
        %1325 = vmatprep.subr.mxu0 0.0
        %1326 = vmatpush1.msra.mxu0 %v1306
        %1327 = vmatprep.subr.mxu0 0.0
        %1328 = vmatpush1.msra.mxu0 %v1307
        %1329 = vmatprep.subr.mxu0 0.0
        %1330 = vmatpush1.msra.mxu0 %v1308
        %1331 = vmatprep.subr.mxu0 0.0
        %1332 = vmatpush1.msra.mxu0 %v1309
        %1333 = vmatprep.subr.mxu0 0.0
        %1334 = vmatpush1.msra.mxu0 %v1310
        %1335 = vmatprep.subr.mxu0 0.0
        %1336 = vmatpush1.msra.mxu0 0.0
        %1337 = vmatprep.subr.mxu0 0.0
        %1338 = vmatpush1.msra.mxu0 0.0
        %1339 = vmatprep.subr.mxu0 0.0
        %1340 = vmatpush1.msra.mxu0 0.0
        %1341 = vmatprep.subr.mxu0 0.0
        %1342 = vmatpush1.msra.mxu0 0.0
        %1343 = vmatprep.subr.mxu0 0.0
        %1344 = vmatpush1.msra.mxu0 0.0
        %1345 = vmatprep.subr.mxu0 0.0
        %1346 = vmatpush1.msra.mxu0 0.0
        %1347 = vmatprep.subr.mxu0 0.0
        %1348 = vmatpush1.msra.mxu0 0.0
        %1349 = vmatprep.subr.mxu0 0.0
        %1350 = vmatpush1.msra.mxu0 0.0
        %1351 = vmatprep.subr.mxu0 0.0
        %1352 = vmatpush1.msra.mxu0 0.0
        %1353 = vmatprep.subr.mxu0 0.0
        %1354 = vmatpush1.msra.mxu0 0.0
        %1355 = vmatprep.subr.mxu0 0.0
        %1356 = vmatpush1.msra.mxu0 0.0
        %1357 = vmatprep.subr.mxu0 0.0
        %1358 = vmatpush1.msra.mxu0 0.0
        %1359 = vmatprep.subr.mxu0 0.0
        %1360 = vmatpush1.msra.mxu0 0.0
        %1361 = vmatprep.subr.mxu0 0.0
        %1362 = vmatpush1.msra.mxu0 0.0
        %1363 = vmatprep.subr.mxu0 0.0
        %1364 = vmatpush1.msra.mxu0 0.0
        %1365 = vmatprep.subr.mxu0 0.0
        %1366 = vmatpush1.msra.mxu0 0.0
        %1367 = vmatprep.subr.mxu0 0.0
        %1368 = vmatpush1.msra.mxu0 0.0
        %1369 = vmatprep.subr.mxu0 0.0
        %1370 = vmatpush1.msra.mxu0 0.0
        %1371 = vmatprep.subr.mxu0 0.0
        %1372 = vmatpush1.msra.mxu0 0.0
        %1373 = vmatprep.subr.mxu0 0.0
        %1374 = vmatpush1.msra.mxu0 0.0
        %1375 = vmatprep.subr.mxu0 0.0
        %1376 = vmatpush1.msra.mxu0 0.0
        %1377 = vmatprep.subr.mxu0 0.0
        %1378 = vmatpush1.msra.mxu0 0.0
        %1379 = vmatprep.subr.mxu0 0.0
        %1380 = vmatpush1.msra.mxu0 0.0
        %1381 = vmatprep.subr.mxu0 0.0
        %1382 = vmatpush1.msra.mxu0 0.0
        %1383 = vmatprep.mubr.f32.mxu0 0.0
        %1384 = vmatmul.mubr.f32.gmra.mrb[0].mxu0 %v1317
        %v1385 = vpop.f32.mrb[0].mxu0
        %v1386 = vadd.f32 %v1315, %v1385
        %v1387 = vpop.f32.mrb[0].mxu0
        %1388 = vdwg.mxu0
        %1390 = vrot.lane.b32.xlu0 %v1386, 32
        %v1391 = vpop.permute.xlu0 %1390
        %v1393 = vsel %vm284, %v1151, %v1391
        %v1394 = vld [vmem:[%s5] sm:$0xff]
        %v1395 = vld [vmem:[%s5 + $0x8] sm:$0xff]
        %v1396 = vld [vmem:[%s5 + $0x10] sm:$0xff]
        %v1397 = vld [vmem:[%s5 + $0x18] sm:$0xff]
        %v1398 = vld [vmem:[%s5 + $0x20] sm:$0xff]
        %v1399 = vld [vmem:[%s5 + $0x28] sm:$0xff]
        %v1400 = vld [vmem:[%s5 + $0x30] sm:$0xff]
        %v1401 = vld [vmem:[%s5 + $0x38] sm:$0xff]
        %v1402 = vld [vmem:[%s6 + $0x6] sm:$0x1]
        %v1403 = vlaneseq
        %v1404 = vshrl.u32 %v1403, 7
        %v1405 = vsub.s32 0, %v1404
        %v1406 = vrot.slane %v1402, %v1405
        %v1408 = vsel %vm1183, %v1393, 0
        %1410 = vmatprep.subr.mxu0 0.0
        %1411 = vmatpush1.msra.mxu0 %v1394
        %1412 = vmatprep.subr.mxu0 0.0
        %1413 = vmatpush1.msra.mxu0 %v1395
        %1414 = vmatprep.subr.mxu0 0.0
        %1415 = vmatpush1.msra.mxu0 %v1396
        %1416 = vmatprep.subr.mxu0 0.0
        %1417 = vmatpush1.msra.mxu0 %v1397
        %1418 = vmatprep.subr.mxu0 0.0
        %1419 = vmatpush1.msra.mxu0 %v1398
        %1420 = vmatprep.subr.mxu0 0.0
        %1421 = vmatpush1.msra.mxu0 %v1399
        %1422 = vmatprep.subr.mxu0 0.0
        %1423 = vmatpush1.msra.mxu0 %v1400
        %1424 = vmatprep.subr.mxu0 0.0
        %1425 = vmatpush1.msra.mxu0 %v1401
        %1426 = vmatprep.subr.mxu0 0.0
        %1427 = vmatpush1.msra.mxu0 0.0
        %1428 = vmatprep.subr.mxu0 0.0
        %1429 = vmatpush1.msra.mxu0 0.0
        %1430 = vmatprep.subr.mxu0 0.0
        %1431 = vmatpush1.msra.mxu0 0.0
        %1432 = vmatprep.subr.mxu0 0.0
        %1433 = vmatpush1.msra.mxu0 0.0
        %1434 = vmatprep.subr.mxu0 0.0
        %1435 = vmatpush1.msra.mxu0 0.0
        %1436 = vmatprep.subr.mxu0 0.0
        %1437 = vmatpush1.msra.mxu0 0.0
        %1438 = vmatprep.subr.mxu0 0.0
        %1439 = vmatpush1.msra.mxu0 0.0
        %1440 = vmatprep.subr.mxu0 0.0
        %1441 = vmatpush1.msra.mxu0 0.0
        %1442 = vmatprep.subr.mxu0 0.0
        %1443 = vmatpush1.msra.mxu0 0.0
        %1444 = vmatprep.subr.mxu0 0.0
        %1445 = vmatpush1.msra.mxu0 0.0
        %1446 = vmatprep.subr.mxu0 0.0
        %1447 = vmatpush1.msra.mxu0 0.0
        %1448 = vmatprep.subr.mxu0 0.0
        %1449 = vmatpush1.msra.mxu0 0.0
        %1450 = vmatprep.subr.mxu0 0.0
        %1451 = vmatpush1.msra.mxu0 0.0
        %1452 = vmatprep.subr.mxu0 0.0
        %1453 = vmatpush1.msra.mxu0 0.0
        %1454 = vmatprep.subr.mxu0 0.0
        %1455 = vmatpush1.msra.mxu0 0.0
        %1456 = vmatprep.subr.mxu0 0.0
        %1457 = vmatpush1.msra.mxu0 0.0
        %1458 = vmatprep.subr.mxu0 0.0
        %1459 = vmatpush1.msra.mxu0 0.0
        %1460 = vmatprep.subr.mxu0 0.0
        %1461 = vmatpush1.msra.mxu0 0.0
        %1462 = vmatprep.subr.mxu0 0.0
        %1463 = vmatpush1.msra.mxu0 0.0
        %1464 = vmatprep.subr.mxu0 0.0
        %1465 = vmatpush1.msra.mxu0 0.0
        %1466 = vmatprep.subr.mxu0 0.0
        %1467 = vmatpush1.msra.mxu0 0.0
        %1468 = vmatprep.subr.mxu0 0.0
        %1469 = vmatpush1.msra.mxu0 0.0
        %1470 = vmatprep.subr.mxu0 0.0
        %1471 = vmatpush1.msra.mxu0 0.0
        %1472 = vmatprep.subr.mxu0 0.0
        %1473 = vmatpush1.msra.mxu0 0.0
        %1474 = vmatprep.mubr.f32.mxu0 0.0
        %1475 = vmatmul.mubr.f32.gmra.mrb[0].mxu0 %v1408
        %v1476 = vpop.f32.mrb[0].mxu0
        %v1477 = vadd.f32 %v1406, %v1476
        %v1478 = vpop.f32.mrb[0].mxu0
        %1479 = vdwg.mxu0
        %v1480 = vxor.u32 %v1477, 2147483648
        %v1481 = vmul.f32 %v1480, 1.442695
        %v1482 = vpow.pop %v1481
        %v1483 = vadd.f32 %v1482, 1.0
        %v1484 = vrcp.pop %v1483
        %v1485 = vmul.f32 1.0, %v1484
        %v1486 = vmul.f32 %v1485, %v1151
        %v1487 = vsub.f32 1.0, %v1485
        %v1488 = vmul.f32 %v1487, %v1386
        %v1489 = vadd.f32 %v1486, %v1488
        %v1490 = vadd.f32 %v274, %v1489
        %v1491 = vld [vmem:[%s6 + $0x7] sm:$0x1]
        %v1492 = vld [vmem:[%s6 + $0x8] sm:$0x1]
        %v1493 = vsel %vm284, %v1490, 0.0
        %1494 = vadd.xlane.f32.xlu0 %v1493
        %v1495 = vpop.xlane.xlu0 %1494
        %v1496 = vmul.f32 %v1495, %v1131
        %v1497 = vsub.f32 %v1490, %v1496
        %v1498 = vmul.f32 %v1497, %v1497
        %v1499 = vsel %vm284, %v1498, 0.0
        %1500 = vadd.xlane.f32.xlu0 %v1499
        %v1501 = vpop.xlane.xlu0 %1500
        %v1502 = vmul.f32 %v1501, %v1131
        %v1503 = vadd.f32 %v1502, 1e-05
        %v1504 = vrsqrt.pop %v1503
        %v1505 = vmul.f32 %v1497, %v1504
        %v1506 = vlaneseq
        %v1507 = vshrl.u32 %v1506, 7
        %v1508 = vsub.s32 0, %v1507
        %v1509 = vrot.slane %v1491, %v1508
        %v1510 = vmul.f32 %v1505, %v1509
        %v1511 = vlaneseq
        %v1512 = vshrl.u32 %v1511, 7
        %v1513 = vsub.s32 0, %v1512
        %v1514 = vrot.slane %v1492, %v1513
        %v1515 = vadd.f32 %v1510, %v1514
        %1516 = vst.msk [vmem:[%s269] sm:$0xff] %vm284, %v1515
        %s1517 = sand.u32 %s181, 1
        %s1518 = scalar_lea.sflag [#allocation3], %s1517
        %s1519 = sand.u32 %s181, 1
        %s1520 = smul.addr %s1519, 8
        %s1521 = scalar_lea.vmem [#allocation2], %s1520
        // Predicated region
        $region49: #{tpu_custom_call.1} parent=47 // pred_check
          %p1522 = pneg %p191
        $region50: #{tpu_custom_call.1} parent=47 // pred_check_branch
          %1524 = sbr.rel (%p1522) target = $region52
        $region51: #{tpu_custom_call.1} parent=47 // pred_region
          %s1526 = ssub.s32 128, 128
          %1527 = vsyncadd %s1518, %s1526
          %s1528 = smul.addr %s21, 128
          %s1529 = scalar_lea.hbm %s7, %s1528
          %s1531 = sshll.u32 %s1521, 4
          %s1532 = int_to_ptr.vmem [resolvable:$true] %s1531
          %1534 = dma.vmem_to_hbm [thread:$0]  %s1532, 128, %s1529, %s1518
        $region52: #{tpu_custom_call.1} parent=47 // pred_fallthru
          _
      $region48: #{tpu_custom_call.1} parent=5 // pred_fallthru
        _
      %p1535 = scmp.le.s32.totalorder 2, %s16
      // Predicated region
      $region53: #{tpu_custom_call.1} parent=5 // pred_check
        %p1536 = pneg %p1535
      $region54: #{tpu_custom_call.1} parent=5 // pred_check_branch
        %1538 = sbr.rel (%p1536) target = $region56
      $region55: #{tpu_custom_call.1} parent=5 // pred_region
        %s1539 = ssub.s32 %s16, 2
        // Predicated region
        $region57: #{tpu_custom_call.1} parent=55 // pred_check
          %p1540 = pneg %p197
        $region58: #{tpu_custom_call.1} parent=55 // pred_check_branch
          %1542 = sbr.rel (%p1540) target = $region60
        $region59: #{tpu_custom_call.1} parent=55 // pred_region
          %s1543 = sand.u32 %s182, 1
          %s1544 = scalar_lea.sflag [#allocation3], %s1543
          %s1545 = sand.u32 %s182, 1
          %s1546 = smul.addr %s1545, 8
          %s1547 = scalar_lea.vmem [#allocation2], %s1546
          %1548 = dma.done %s1544, 128
        $region60: #{tpu_custom_call.1} parent=55 // pred_fallthru
          _
      $region56: #{tpu_custom_call.1} parent=5 // pred_fallthru
        _
    $region6: #{tpu_custom_call.1} parent=1 // loop_footer
      %s20 = sadd.s32 1, %s16
    $region7: #{tpu_custom_call.1} parent=1 // loop_footer_branch
      %15 = sbr.rel target = $region3
    $region8: #{tpu_custom_call.1} parent=1 // loop_exit
      _
    %1549 = vsyncpa [#allocation3], 1
    %s1550 = scalar_lea.sflag [#allocation3], 1
    %1551 = vsyncpa %s1550, 1

</llo_original>
